<compile_context>
chip_gen: v7x
topology: tpu7x:2x2x1
jax: 0.10.0
libtpu: 0.0.40
codegen_flags: <defaults>
</compile_context>

<pallas_src>
import functools

import jax
import jax.numpy as jnp
from jax.experimental import pallas as pl
from jax.experimental.pallas import tpu as pltpu

BN_EPS = 1e-5
TM_DEFAULT = 512            # M-tile rows for the conv kernels
TS_DEFAULT = 512            # spatial-tile rows for the fused bn-relu-pool-fc kernel
VMEM_LIMIT_BYTES = 32 * 1024 * 1024


def _round_up(x, m):
    return (x + m - 1) // m * m


def _plan_m(m, t_default=TM_DEFAULT, min_splits=2):
    """Pick (tile, padded extent, grid) for an M-like (row) axis.

    Tiles are multiples of 16 (bf16 sublane packing); when the extent allows, the
    grid gets >= `min_splits` steps so a "parallel" axis can use both v7x cores.
    """
    m16 = _round_up(m, 16)
    g = max(min_splits, pl.cdiv(m16, t_default))
    tm = min(_round_up(pl.cdiv(m16, g), 16), m16)
    m_pad = _round_up(m16, tm)
    return tm, m_pad, m_pad // tm


# ---------------------------------------------------------------------------
# Pallas kernels
# ---------------------------------------------------------------------------
def _packed_stats(y):
    """Pack (1,Cp) sum / sumsq of y into a (1, 2, Cp) f32 value (sublane 0 / 1)."""
    s = jnp.sum(y, axis=0, keepdims=True)
    sq = jnp.sum(y * y, axis=0, keepdims=True)
    sel = jax.lax.broadcasted_iota(jnp.int32, (2, 1), 0) == 0
    return jnp.where(sel, s, sq)[None]          # (1, 2, Cp)


def conv_stats_kernel(p_ref, w_ref, y_ref, st_ref):
    """Conv tile (im2col matmul) + packed BN partial stats.

    p_ref: (TM, Kp) bf16 patches   w_ref: (Kp, Cp) bf16 weights
    y_ref: (TM, Cp) bf16 pre-BN conv output
    st_ref: (1, 2, Cp) f32 -- sublane 0 = sum(y), sublane 1 = sum(y*y).
    Zero-padded patch rows / K columns / output channels contribute exact zeros,
    so no row masking is needed here.
    """
    y = jnp.dot(p_ref[...], w_ref[...], preferred_element_type=jnp.float32)
    y_ref[...] = y.astype(y_ref.dtype)
    st_ref[...] = _packed_stats(y)


def bn_conv_stats_kernel(p_ref, sc_ref, sh_ref, w_ref, y_ref, st_ref, *, tm, m_true):
    """Fused BN1 scale/shift + ReLU on the patch columns, conv2 matmul, BN2 stats.

    p_ref: (TM, Kp2) bf16 pre-BN1 patches; sc_ref / sh_ref: (1, Kp2) f32 per-column
    BN1 scale/shift (per-channel values tiled over the 9 taps).
    Padded M rows become relu(shift) != 0 after the affine, so the stats mask them.
    """
    a = jnp.maximum(p_ref[...].astype(jnp.float32) * sc_ref[...] + sh_ref[...], 0.0)
    y = jnp.dot(a.astype(jnp.bfloat16), w_ref[...],
                preferred_element_type=jnp.float32)
    y_ref[...] = y.astype(y_ref.dtype)
    row = jax.lax.broadcasted_iota(jnp.int32, (tm, 1), 0) + pl.program_id(0) * tm
    yv = jnp.where(row < m_true, y, 0.0)        # mask rows past the true M extent
    st_ref[...] = _packed_stats(yv)


def bn_relu_pool_fc_kernel(y_ref, sc_ref, sh_ref, w_ref, b_ref, out_ref, acc_ref,
                           *, ts, s_true, inv_s):
    """BN2 scale/shift + ReLU + global average pool + classifier for one sample.

    y_ref: (1, TS, Cp2) bf16 pre-BN2 tile; acc_ref: (1, Cp2) f32 channel-sum scratch
    (resident across the spatial grid axis); out_ref: (1, 1, NCp) f32 logits.
    """
    j = pl.program_id(1)

    @pl.when(j == 0)
    def _init():
        acc_ref[...] = jnp.zeros_like(acc_ref)

    act = jnp.maximum(y_ref[0].astype(jnp.float32) * sc_ref[...] + sh_ref[...], 0.0)
    row = jax.lax.broadcasted_iota(jnp.int32, (ts, 1), 0) + j * ts
    act = jnp.where(row < s_true, act, 0.0)     # padded rows -> relu(shift) != 0
    acc_ref[...] += jnp.sum(act, axis=0, keepdims=True)

    @pl.when(j == pl.num_programs(1) - 1)
    def _finalize():
        pooled = (acc_ref[...] * inv_s).astype(jnp.bfloat16)         # (1, Cp2)
        out_ref[0] = (
            jnp.dot(pooled, w_ref[...], preferred_element_type=jnp.float32)
            + b_ref[...]
        )


# ---------------------------------------------------------------------------
# pallas_call wrappers
# ---------------------------------------------------------------------------
def _params(dim_sems):
    return pltpu.CompilerParams(
        dimension_semantics=dim_sems, vmem_limit_bytes=VMEM_LIMIT_BYTES
    )


def conv1_call(patches, w_flat, tm):
    m_pad, kp = patches.shape
    cp = w_flat.shape[1]
    g = m_pad // tm
    y, stats = pl.pallas_call(
        conv_stats_kernel,
        out_shape=(
            jax.ShapeDtypeStruct((m_pad, cp), jnp.bfloat16),
            jax.ShapeDtypeStruct((g, 2, cp), jnp.float32),
        ),
        grid_spec=pltpu.PrefetchScalarGridSpec(
            num_scalar_prefetch=0,
            grid=(g,),
            in_specs=[
                pl.BlockSpec((tm, kp), lambda i: (i, 0)),
                pl.BlockSpec((kp, cp), lambda i: (0, 0)),
            ],
            out_specs=[
                pl.BlockSpec((tm, cp), lambda i: (i, 0)),
                pl.BlockSpec((1, 2, cp), lambda i: (i, 0, 0)),
            ],
        ),
        compiler_params=_params(("parallel",)),
        cost_estimate=pl.CostEstimate(
            flops=2 * m_pad * kp * cp, transcendentals=0,
            bytes_accessed=m_pad * kp * 2 + kp * cp * 2
            + m_pad * cp * 2 + g * 2 * cp * 4,
        ),
    )(patches, w_flat)
    return y, stats[:, 0, :].sum(axis=0), stats[:, 1, :].sum(axis=0)


def conv2_call(patches, scale_k, shift_k, w_flat, m_true, tm):
    m_pad, kp = patches.shape
    cp = w_flat.shape[1]
    g = m_pad // tm
    kern = functools.partial(bn_conv_stats_kernel, tm=tm, m_true=m_true)
    y, stats = pl.pallas_call(
        kern,
        out_shape=(
            jax.ShapeDtypeStruct((m_pad, cp), jnp.bfloat16),
            jax.ShapeDtypeStruct((g, 2, cp), jnp.float32),
        ),
        grid_spec=pltpu.PrefetchScalarGridSpec(
            num_scalar_prefetch=0,
            grid=(g,),
            in_specs=[
                pl.BlockSpec((tm, kp), lambda i: (i, 0)),
                pl.BlockSpec((1, kp), lambda i: (0, 0)),
                pl.BlockSpec((1, kp), lambda i: (0, 0)),
                pl.BlockSpec((kp, cp), lambda i: (0, 0)),
            ],
            out_specs=[
                pl.BlockSpec((tm, cp), lambda i: (i, 0)),
                pl.BlockSpec((1, 2, cp), lambda i: (i, 0, 0)),
            ],
        ),
        compiler_params=_params(("parallel",)),
        cost_estimate=pl.CostEstimate(
            flops=2 * m_pad * kp * cp + 3 * m_pad * kp, transcendentals=0,
            bytes_accessed=m_pad * kp * 2 + kp * cp * 2
            + m_pad * cp * 2 + g * 2 * cp * 4,
        ),
    )(patches, scale_k, shift_k, w_flat)
    return y, stats[:, 0, :].sum(axis=0), stats[:, 1, :].sum(axis=0)


def bn_relu_pool_fc_call(y3, scale, shift, w_cls, b_cls, s_true, ts):
    n, s_pad, cp = y3.shape
    ncp = w_cls.shape[1]
    gs = s_pad // ts
    kern = functools.partial(
        bn_relu_pool_fc_kernel, ts=ts, s_true=s_true, inv_s=1.0 / float(s_true)
    )
    logits = pl.pallas_call(
        kern,
        out_shape=jax.ShapeDtypeStruct((n, 1, ncp), jnp.float32),
        grid_spec=pltpu.PrefetchScalarGridSpec(
            num_scalar_prefetch=0,
            grid=(n, gs),
            in_specs=[
                pl.BlockSpec((1, ts, cp), lambda i, j: (i, j, 0)),
                pl.BlockSpec((1, cp), lambda i, j: (0, 0)),
                pl.BlockSpec((1, cp), lambda i, j: (0, 0)),
                pl.BlockSpec((cp, ncp), lambda i, j: (0, 0)),
                pl.BlockSpec((1, ncp), lambda i, j: (0, 0)),
            ],
            out_specs=pl.BlockSpec((1, 1, ncp), lambda i, j: (i, 0, 0)),
            scratch_shapes=[pltpu.VMEM((1, cp), jnp.float32)],
        ),
        compiler_params=_params(("parallel", "arbitrary")),
        cost_estimate=pl.CostEstimate(
            flops=3 * n * s_pad * cp + 2 * n * cp * ncp, transcendentals=0,
            bytes_accessed=n * s_pad * cp * 2 + cp * ncp * 2 + n * ncp * 4,
        ),
    )(y3, scale, shift, w_cls, b_cls)
    return logits[:, 0, :]


# ---------------------------------------------------------------------------
# JAX glue: im2col, BN scale/shift folding, full forward
# ---------------------------------------------------------------------------
def im2col(x, k, stride):
    """x: (N, H, W, C) -> patches (N*Ho*Wo, k*k*C) in (kh, kw, cin) column order.

    PyTorch Conv2d default padding=0 (VALID) — matches the reference module.
    """
    n, h, w, c = x.shape
    ho = (h - k) // stride + 1
    wo = (w - k) // stride + 1
    cols = []
    for kh in range(k):
        for kw in range(k):
            cols.append(
                x[:, kh: kh + stride * (ho - 1) + 1: stride,
                     kw: kw + stride * (wo - 1) + 1: stride, :]
            )
    patches = jnp.stack(cols, axis=3)            # (N, Ho, Wo, k*k, C)
    return patches.reshape(n * ho * wo, k * k * c), ho, wo


def bn_scale_shift(sum_c, sq_c, count, gamma, beta, cp):
    """Fold batch-stats (train-mode) BN into per-channel scale/shift (f32, padded)."""
    c = gamma.shape[0]
    gamma_p = jnp.pad(gamma, (0, cp - c), constant_values=1.0)
    beta_p = jnp.pad(beta, (0, cp - c))
    mean = sum_c / count
    var = jnp.maximum(sq_c / count - mean * mean, 0.0)   # biased var (train-mode BN)
    scale = gamma_p * jax.lax.rsqrt(var + BN_EPS)
    shift = beta_p - mean * scale
    return scale.reshape(1, cp), shift.reshape(1, cp)


def conv_network_forward(x_nhwc, params):
    """ConvNetwork forward. x_nhwc: (N, H, W, Cin) f32 -> (N, num_classes) f32."""
    n = x_nhwc.shape[0]
    x = x_nhwc.astype(jnp.bfloat16)

    # ---- block1: Conv(3, s=2) [bias dropped: cancelled by train-mode BN] + stats ----
    w1, _b1, g1, bt1 = params["block1"]
    kh, kw, cin1, c1 = w1.shape
    cp1 = _round_up(c1, 128)
    k1 = kh * kw * cin1
    kp1 = _round_up(k1, 16)

    patches1, ho1, wo1 = im2col(x, kh, stride=2)
    m1 = patches1.shape[0]
    tm1, m1_pad, _ = _plan_m(m1)
    patches1 = jnp.pad(patches1, ((0, m1_pad - m1), (0, kp1 - k1)))
    w1_flat = jnp.pad(w1.reshape(k1, c1).astype(jnp.bfloat16),
                      ((0, kp1 - k1), (0, cp1 - c1)))
    y1, s1, q1 = conv1_call(patches1, w1_flat, tm1)
    scale1, shift1 = bn_scale_shift(s1, q1, m1, g1, bt1, cp1)

    # ---- block2: BN1+ReLU fused into the conv2 input path (applied per patch
    #      column); block1's padded Cp1 channels carried through (w2 cin rows
    #      zero-padded) so there is no lane-slice relayout between kernels. ----
    w2, _b2, g2, bt2 = params["block2"]
    _, _, cin2, c2 = w2.shape
    cp2 = _round_up(c2, 128)
    k2 = kh * kw * cp1                  # multiple of 16 since cp1 % 128 == 0

    y1_4d = y1[:m1].reshape(n, ho1, wo1, cp1)        # pre-BN1 bf16, padded channels
    patches2, ho2, wo2 = im2col(y1_4d, kh, stride=2)
    m2 = patches2.shape[0]
    tm2, m2_pad, _ = _plan_m(m2)
    patches2 = jnp.pad(patches2, ((0, m2_pad - m2), (0, 0)))
    w2_pad = jnp.pad(w2.astype(jnp.bfloat16),
                     ((0, 0), (0, 0), (0, cp1 - cin2), (0, 0)))
    w2_flat = jnp.pad(w2_pad.reshape(k2, c2), ((0, 0), (0, cp2 - c2)))
    scale1_k = jnp.tile(scale1, (1, kh * kw))        # per-column BN1 scale over taps
    shift1_k = jnp.tile(shift1, (1, kh * kw))
    y2, s2, q2 = conv2_call(patches2, scale1_k, shift1_k, w2_flat, m2, tm2)
    scale2, shift2 = bn_scale_shift(s2, q2, m2, g2, bt2, cp2)

    # ---- BN2 + ReLU + global average pool + classifier (single fused kernel) ----
    w_cls, b_cls = params["classifier"]
    nc = w_cls.shape[-1]
    ncp = _round_up(nc, 128)
    w_cls_p = jnp.pad(w_cls.astype(jnp.bfloat16),
                      ((0, cp2 - w_cls.shape[0]), (0, ncp - nc)))
    b_cls_p = jnp.pad(b_cls.reshape(1, nc).astype(jnp.float32), ((0, 0), (0, ncp - nc)))

    s_sp = ho2 * wo2
    ts = min(TS_DEFAULT, _round_up(s_sp, 16))
    s_pad = _round_up(s_sp, ts)
    y2r = jnp.pad(y2[:m2].reshape(n, s_sp, cp2), ((0, 0), (0, s_pad - s_sp), (0, 0)))
    logits = bn_relu_pool_fc_call(y2r, scale2, shift2, w_cls_p, b_cls_p, s_sp, ts)
    return logits[:, :nc]


def init_params(key, dim, in_channels, num_classes):
    """Deterministic synthetic init matching the PyTorch parameter shapes."""
    ks = jax.random.split(key, 6)

    def conv_block(kw_key, kb_key, cin, cout):
        w = jax.random.normal(kw_key, (3, 3, cin, cout), jnp.float32) * 0.1
        b = jax.random.normal(kb_key, (cout,), jnp.float32) * 0.1   # cancelled by BN
        gamma = jnp.ones((cout,), jnp.float32)
        beta = jnp.zeros((cout,), jnp.float32)
        return (w, b, gamma, beta)

    return {
        "block1": conv_block(ks[0], ks[1], in_channels, dim),
        "block2": conv_block(ks[2], ks[3], dim, 2 * dim),
        "classifier": (
            jax.random.normal(ks[4], (2 * dim, num_classes), jnp.float32) * 0.1,
            jax.random.normal(ks[5], (num_classes,), jnp.float32) * 0.1,
        ),
    }


# ---------------------------------------------------------------------------
# Main
# ---------------------------------------------------------------------------
if __name__ == "__main__":
    # Small shapes consistent with ConvNetwork(dim, in_channels, num_classes).
    batch, in_channels, H, W = 2, 3, 16, 16
    dim, num_classes = 64, 10      # pooling_depth = 2*dim = 128 (lane-dense)

    key = jax.random.PRNGKey(0)
    k_x, k_p = jax.random.split(key)
    # Inputs are conceptually NCHW (2, 3, 16, 16) in PyTorch; we build NHWC directly.
    x_nhwc = jax.random.normal(k_x, (batch, H, W, in_channels), jnp.float32)
    params = init_params(k_p, dim, in_channels, num_classes)

    fwd = jax.jit(functools.partial(conv_network_forward, params=params))
    logits = fwd(x_nhwc)
    jax.block_until_ready(logits)

    assert logits.shape == (batch, num_classes), logits.shape
    assert logits.dtype == jnp.float32
    assert bool(jnp.all(jnp.isfinite(logits)))
    print("KERNEL_OK")
</pallas_src>

<mosaic_0001>
module attributes {stable_mosaic.version = 11 : i64} {
  func.func @conv_stats_kernel(%arg0: i32, %arg1: memref<64x32xbf16, #tpu.memory_space<vmem>>, %arg2: memref<32x128xbf16, #tpu.memory_space<vmem>>, %arg3: memref<64x128xbf16, #tpu.memory_space<vmem>>, %arg4: memref<1x2x128xf32, #tpu.memory_space<vmem>>) attributes {dimension_semantics = [#tpu.dimension_semantics<parallel>], iteration_bounds = array<i64: 2>, scalar_prefetch = 0 : i64, scratch_operands = 0 : i64, tpu.core_type = #tpu.core_type<tc>, window_params = [{transform_indices = @transform_0, window_bounds = array<i64: 64, 32>}, {pipeline_mode = #tpu.pipeline_mode<synchronous>, transform_indices = @transform_1, window_bounds = array<i64: 32, 128>}, {transform_indices = @transform_2, window_bounds = array<i64: 64, 128>}, {transform_indices = @transform_3, window_bounds = array<i64: 1, 2, 128>}]} {
    %c0 = arith.constant 0 : index
    %c0_0 = arith.constant 0 : index
    %0 = vector.load %arg1[%c0, %c0_0] : memref<64x32xbf16, #tpu.memory_space<vmem>>, vector<64x32xbf16>
    %c0_1 = arith.constant 0 : index
    %c0_2 = arith.constant 0 : index
    %1 = vector.load %arg2[%c0_1, %c0_2] : memref<32x128xbf16, #tpu.memory_space<vmem>>, vector<32x128xbf16>
    %cst = arith.constant dense<0.000000e+00> : vector<64x128xf32>
    %2 = tpu.matmul %0, %1, %cst {dimension_numbers = #tpu.dot_dimension_numbers<[1], [0], [0], [1], [0, 0, 1, 1], [], []>} : vector<64x32xbf16>, vector<32x128xbf16>, vector<64x128xf32> -> vector<64x128xf32>
    %3 = arith.truncf %2 : vector<64x128xf32> to vector<64x128xbf16>
    %c0_3 = arith.constant 0 : index
    %c0_4 = arith.constant 0 : index
    %4 = vector.load %arg3[%c0_3, %c0_4] : memref<64x128xbf16, #tpu.memory_space<vmem>>, vector<64x128xbf16>
    tpu.vector_store %arg3[%c0_3, %c0_4], %3 {strides = array<i32>} : memref<64x128xbf16, #tpu.memory_space<vmem>>, vector<64x128xbf16>,
    %cst_5 = arith.constant dense<0.000000e+00> : vector<128xf32>
    %5 = vector.multi_reduction <add>, %2, %cst_5 [0] : vector<64x128xf32> to vector<128xf32>
    %6 = vector.shape_cast %5 : vector<128xf32> to vector<1x128xf32>
    %7 = arith.mulf %2, %2 : vector<64x128xf32>
    %cst_6 = arith.constant dense<0.000000e+00> : vector<128xf32>
    %8 = vector.multi_reduction <add>, %7, %cst_6 [0] : vector<64x128xf32> to vector<128xf32>
    %9 = vector.shape_cast %8 : vector<128xf32> to vector<1x128xf32>
    %10 = tpu.iota {dimensions = array<i32: 0>} : vector<2x1xi32>
    %c0_i32 = arith.constant 0 : i32
    %11 = vector.broadcast %c0_i32 : i32 to vector<2x1xi32>
    %12 = arith.cmpi eq, %10, %11 : vector<2x1xi32>
    %13 = vector.shape_cast %12 : vector<2x1xi1> to vector<2x1xi1>
    %14 = vector.broadcast %13 : vector<2x1xi1> to vector<2x128xi1>
    %15 = vector.shape_cast %6 : vector<1x128xf32> to vector<1x128xf32>
    %16 = vector.broadcast %15 : vector<1x128xf32> to vector<2x128xf32>
    %17 = vector.shape_cast %9 : vector<1x128xf32> to vector<1x128xf32>
    %18 = vector.broadcast %17 : vector<1x128xf32> to vector<2x128xf32>
    %19 = arith.select %14, %16, %18 : vector<2x128xi1>, vector<2x128xf32>
    %20 = vector.shape_cast %19 : vector<2x128xf32> to vector<1x2x128xf32>
    %c0_7 = arith.constant 0 : index
    %c0_8 = arith.constant 0 : index
    %c0_9 = arith.constant 0 : index
    %21 = vector.load %arg4[%c0_7, %c0_8, %c0_9] : memref<1x2x128xf32, #tpu.memory_space<vmem>>, vector<1x2x128xf32>
    tpu.vector_store %arg4[%c0_7, %c0_8, %c0_9], %20 {strides = array<i32>} : memref<1x2x128xf32, #tpu.memory_space<vmem>>, vector<1x2x128xf32>,
    return
  }
  func.func @transform_0(%arg0: i32) -> (i32, i32) {
    %c0_i32 = arith.constant 0 : i32
    %c0_i32_0 = arith.constant 0 : i32
    return %arg0, %c0_i32 : i32, i32
  }
  func.func @transform_1(%arg0: i32) -> (i32, i32) {
    %c0_i32 = arith.constant 0 : i32
    %c0_i32_0 = arith.constant 0 : i32
    %c0_i32_1 = arith.constant 0 : i32
    return %c0_i32, %c0_i32_0 : i32, i32
  }
  func.func @transform_2(%arg0: i32) -> (i32, i32) {
    %c0_i32 = arith.constant 0 : i32
    %c0_i32_0 = arith.constant 0 : i32
    return %arg0, %c0_i32 : i32, i32
  }
  func.func @transform_3(%arg0: i32) -> (i32, i32, i32) {
    %c0_i32 = arith.constant 0 : i32
    %c0_i32_0 = arith.constant 0 : i32
    %c0_i32_1 = arith.constant 0 : i32
    return %arg0, %c0_i32, %c0_i32_0 : i32, i32, i32
  }
}

module attributes {stable_mosaic.version = 11 : i64} {
  func.func @bn_conv_stats_kernel(%arg0: i32, %arg1: memref<16x1152xbf16, #tpu.memory_space<vmem>>, %arg2: memref<1x1152xf32, #tpu.memory_space<vmem>>, %arg3: memref<1x1152xf32, #tpu.memory_space<vmem>>, %arg4: memref<1152x128xbf16, #tpu.memory_space<vmem>>, %arg5: memref<16x128xbf16, #tpu.memory_space<vmem>>, %arg6: memref<1x2x128xf32, #tpu.memory_space<vmem>>) attributes {dimension_semantics = [#tpu.dimension_semantics<parallel>], iteration_bounds = array<i64: 2>, scalar_prefetch = 0 : i64, scratch_operands = 0 : i64, tpu.core_type = #tpu.core_type<tc>, window_params = [{transform_indices = @transform_0, window_bounds = array<i64: 16, 1152>}, {pipeline_mode = #tpu.pipeline_mode<synchronous>, transform_indices = @transform_1, window_bounds = array<i64: 1, 1152>}, {pipeline_mode = #tpu.pipeline_mode<synchronous>, transform_indices = @transform_2, window_bounds = array<i64: 1, 1152>}, {pipeline_mode = #tpu.pipeline_mode<synchronous>, transform_indices = @transform_3, window_bounds = array<i64: 1152, 128>}, {transform_indices = @transform_4, window_bounds = array<i64: 16, 128>}, {transform_indices = @transform_5, window_bounds = array<i64: 1, 2, 128>}]} {
    %c0 = arith.constant 0 : index
    %c0_0 = arith.constant 0 : index
    %0 = vector.load %arg1[%c0, %c0_0] : memref<16x1152xbf16, #tpu.memory_space<vmem>>, vector<16x1152xbf16>
    %1 = arith.extf %0 : vector<16x1152xbf16> to vector<16x1152xf32>
    %c0_1 = arith.constant 0 : index
    %c0_2 = arith.constant 0 : index
    %2 = vector.load %arg2[%c0_1, %c0_2] : memref<1x1152xf32, #tpu.memory_space<vmem>>, vector<1x1152xf32>
    %3 = vector.broadcast %2 : vector<1x1152xf32> to vector<16x1152xf32>
    %4 = arith.mulf %1, %3 : vector<16x1152xf32>
    %c0_3 = arith.constant 0 : index
    %c0_4 = arith.constant 0 : index
    %5 = vector.load %arg3[%c0_3, %c0_4] : memref<1x1152xf32, #tpu.memory_space<vmem>>, vector<1x1152xf32>
    %6 = vector.broadcast %5 : vector<1x1152xf32> to vector<16x1152xf32>
    %7 = arith.addf %4, %6 : vector<16x1152xf32>
    %cst = arith.constant 0.000000e+00 : f32
    %8 = vector.broadcast %cst : f32 to vector<16x1152xf32>
    %9 = arith.maximumf %7, %8 : vector<16x1152xf32>
    %10 = arith.truncf %9 : vector<16x1152xf32> to vector<16x1152xbf16>
    %c0_5 = arith.constant 0 : index
    %c0_6 = arith.constant 0 : index
    %11 = vector.load %arg4[%c0_5, %c0_6] : memref<1152x128xbf16, #tpu.memory_space<vmem>>, vector<1152x128xbf16>
    %cst_7 = arith.constant dense<0.000000e+00> : vector<16x128xf32>
    %12 = tpu.matmul %10, %11, %cst_7 {dimension_numbers = #tpu.dot_dimension_numbers<[1], [0], [0], [1], [0, 0, 1, 1], [], []>} : vector<16x1152xbf16>, vector<1152x128xbf16>, vector<16x128xf32> -> vector<16x128xf32>
    %13 = arith.truncf %12 : vector<16x128xf32> to vector<16x128xbf16>
    %c0_8 = arith.constant 0 : index
    %c0_9 = arith.constant 0 : index
    %14 = vector.load %arg5[%c0_8, %c0_9] : memref<16x128xbf16, #tpu.memory_space<vmem>>, vector<16x128xbf16>
    tpu.vector_store %arg5[%c0_8, %c0_9], %13 {strides = array<i32>} : memref<16x128xbf16, #tpu.memory_space<vmem>>, vector<16x128xbf16>,
    %15 = tpu.iota {dimensions = array<i32: 0>} : vector<16x1xi32>
    %c16_i32 = arith.constant 16 : i32
    %16 = arith.muli %arg0, %c16_i32 : i32
    %17 = vector.broadcast %16 : i32 to vector<16x1xi32>
    %18 = arith.addi %15, %17 : vector<16x1xi32>
    %c18_i32 = arith.constant 18 : i32
    %19 = vector.broadcast %c18_i32 : i32 to vector<16x1xi32>
    %20 = arith.cmpi slt, %18, %19 : vector<16x1xi32>
    %cst_10 = arith.constant 0.000000e+00 : f32
    %21 = vector.shape_cast %20 : vector<16x1xi1> to vector<16x1xi1>
    %22 = vector.broadcast %21 : vector<16x1xi1> to vector<16x128xi1>
    %23 = vector.broadcast %cst_10 : f32 to vector<16x128xf32>
    %24 = arith.select %22, %12, %23 : vector<16x128xi1>, vector<16x128xf32>
    %cst_11 = arith.constant dense<0.000000e+00> : vector<128xf32>
    %25 = vector.multi_reduction <add>, %24, %cst_11 [0] : vector<16x128xf32> to vector<128xf32>
    %26 = vector.shape_cast %25 : vector<128xf32> to vector<1x128xf32>
    %27 = arith.mulf %24, %24 : vector<16x128xf32>
    %cst_12 = arith.constant dense<0.000000e+00> : vector<128xf32>
    %28 = vector.multi_reduction <add>, %27, %cst_12 [0] : vector<16x128xf32> to vector<128xf32>
    %29 = vector.shape_cast %28 : vector<128xf32> to vector<1x128xf32>
    %30 = tpu.iota {dimensions = array<i32: 0>} : vector<2x1xi32>
    %c0_i32 = arith.constant 0 : i32
    %31 = vector.broadcast %c0_i32 : i32 to vector<2x1xi32>
    %32 = arith.cmpi eq, %30, %31 : vector<2x1xi32>
    %33 = vector.shape_cast %32 : vector<2x1xi1> to vector<2x1xi1>
    %34 = vector.broadcast %33 : vector<2x1xi1> to vector<2x128xi1>
    %35 = vector.shape_cast %26 : vector<1x128xf32> to vector<1x128xf32>
    %36 = vector.broadcast %35 : vector<1x128xf32> to vector<2x128xf32>
    %37 = vector.shape_cast %29 : vector<1x128xf32> to vector<1x128xf32>
    %38 = vector.broadcast %37 : vector<1x128xf32> to vector<2x128xf32>
    %39 = arith.select %34, %36, %38 : vector<2x128xi1>, vector<2x128xf32>
    %40 = vector.shape_cast %39 : vector<2x128xf32> to vector<1x2x128xf32>
    %c0_13 = arith.constant 0 : index
    %c0_14 = arith.constant 0 : index
    %c0_15 = arith.constant 0 : index
    %41 = vector.load %arg6[%c0_13, %c0_14, %c0_15] : memref<1x2x128xf32, #tpu.memory_space<vmem>>, vector<1x2x128xf32>
    tpu.vector_store %arg6[%c0_13, %c0_14, %c0_15], %40 {strides = array<i32>} : memref<1x2x128xf32, #tpu.memory_space<vmem>>, vector<1x2x128xf32>,
    return
  }
  func.func @transform_0(%arg0: i32) -> (i32, i32) {
    %c0_i32 = arith.constant 0 : i32
    %c0_i32_0 = arith.constant 0 : i32
    return %arg0, %c0_i32 : i32, i32
  }
  func.func @transform_1(%arg0: i32) -> (i32, i32) {
    %c0_i32 = arith.constant 0 : i32
    %c0_i32_0 = arith.constant 0 : i32
    %c0_i32_1 = arith.constant 0 : i32
    return %c0_i32, %c0_i32_0 : i32, i32
  }
  func.func @transform_2(%arg0: i32) -> (i32, i32) {
    %c0_i32 = arith.constant 0 : i32
    %c0_i32_0 = arith.constant 0 : i32
    %c0_i32_1 = arith.constant 0 : i32
    return %c0_i32, %c0_i32_0 : i32, i32
  }
  func.func @transform_3(%arg0: i32) -> (i32, i32) {
    %c0_i32 = arith.constant 0 : i32
    %c0_i32_0 = arith.constant 0 : i32
    %c0_i32_1 = arith.constant 0 : i32
    return %c0_i32, %c0_i32_0 : i32, i32
  }
  func.func @transform_4(%arg0: i32) -> (i32, i32) {
    %c0_i32 = arith.constant 0 : i32
    %c0_i32_0 = arith.constant 0 : i32
    return %arg0, %c0_i32 : i32, i32
  }
  func.func @transform_5(%arg0: i32) -> (i32, i32, i32) {
    %c0_i32 = arith.constant 0 : i32
    %c0_i32_0 = arith.constant 0 : i32
    %c0_i32_1 = arith.constant 0 : i32
    return %arg0, %c0_i32, %c0_i32_0 : i32, i32, i32
  }
}

module attributes {stable_mosaic.version = 11 : i64} {
  func.func @bn_relu_pool_fc_kernel(%arg0: i32, %arg1: i32, %arg2: memref<1x16x128xbf16, #tpu.memory_space<vmem>>, %arg3: memref<1x128xf32, #tpu.memory_space<vmem>>, %arg4: memref<1x128xf32, #tpu.memory_space<vmem>>, %arg5: memref<128x128xbf16, #tpu.memory_space<vmem>>, %arg6: memref<1x128xf32, #tpu.memory_space<vmem>>, %arg7: memref<1x1x128xf32, #tpu.memory_space<vmem>>, %arg8: memref<1x128xf32, #tpu.memory_space<vmem>>) attributes {dimension_semantics = [#tpu.dimension_semantics<parallel>, #tpu.dimension_semantics<arbitrary>], iteration_bounds = array<i64: 2, 1>, scalar_prefetch = 0 : i64, scratch_operands = 1 : i64, tpu.core_type = #tpu.core_type<tc>, window_params = [{transform_indices = @transform_0, window_bounds = array<i64: 1, 16, 128>}, {pipeline_mode = #tpu.pipeline_mode<synchronous>, transform_indices = @transform_1, window_bounds = array<i64: 1, 128>}, {pipeline_mode = #tpu.pipeline_mode<synchronous>, transform_indices = @transform_2, window_bounds = array<i64: 1, 128>}, {pipeline_mode = #tpu.pipeline_mode<synchronous>, transform_indices = @transform_3, window_bounds = array<i64: 128, 128>}, {pipeline_mode = #tpu.pipeline_mode<synchronous>, transform_indices = @transform_4, window_bounds = array<i64: 1, 128>}, {transform_indices = @transform_5, window_bounds = array<i64: 1, 1, 128>}]} {
    %c0_i32 = arith.constant 0 : i32
    %0 = arith.cmpi eq, %arg1, %c0_i32 : i32
    %1 = arith.extui %0 : i1 to i32
    %c0_i32_0 = arith.constant 0 : i32
    %2 = arith.cmpi ne, %1, %c0_i32_0 : i32
    scf.if %2 {
      %cst_15 = arith.constant 0.000000e+00 : f32
      %32 = vector.broadcast %cst_15 : f32 to vector<1x128xf32>
      %c0_16 = arith.constant 0 : index
      %c0_17 = arith.constant 0 : index
      %33 = vector.load %arg8[%c0_16, %c0_17] : memref<1x128xf32, #tpu.memory_space<vmem>>, vector<1x128xf32>
      tpu.vector_store %arg8[%c0_16, %c0_17], %32 {strides = array<i32>} : memref<1x128xf32, #tpu.memory_space<vmem>>, vector<1x128xf32>,
    } else {
    }
    %c0 = arith.constant 0 : index
    %c0_1 = arith.constant 0 : index
    %c0_2 = arith.constant 0 : index
    %3 = vector.load %arg2[%c0, %c0_1, %c0_2] : memref<1x16x128xbf16, #tpu.memory_space<vmem>>, vector<1x16x128xbf16>
    %4 = vector.shape_cast %3 : vector<1x16x128xbf16> to vector<16x128xbf16>
    %5 = arith.extf %4 : vector<16x128xbf16> to vector<16x128xf32>
    %c0_3 = arith.constant 0 : index
    %c0_4 = arith.constant 0 : index
    %6 = vector.load %arg3[%c0_3, %c0_4] : memref<1x128xf32, #tpu.memory_space<vmem>>, vector<1x128xf32>
    %7 = vector.broadcast %6 : vector<1x128xf32> to vector<16x128xf32>
    %8 = arith.mulf %5, %7 : vector<16x128xf32>
    %c0_5 = arith.constant 0 : index
    %c0_6 = arith.constant 0 : index
    %9 = vector.load %arg4[%c0_5, %c0_6] : memref<1x128xf32, #tpu.memory_space<vmem>>, vector<1x128xf32>
    %10 = vector.broadcast %9 : vector<1x128xf32> to vector<16x128xf32>
    %11 = arith.addf %8, %10 : vector<16x128xf32>
    %cst = arith.constant 0.000000e+00 : f32
    %12 = vector.broadcast %cst : f32 to vector<16x128xf32>
    %13 = arith.maximumf %11, %12 : vector<16x128xf32>
    %14 = tpu.iota {dimensions = array<i32: 0>} : vector<16x1xi32>
    %c16_i32 = arith.constant 16 : i32
    %15 = arith.muli %arg1, %c16_i32 : i32
    %16 = vector.broadcast %15 : i32 to vector<16x1xi32>
    %17 = arith.addi %14, %16 : vector<16x1xi32>
    %c9_i32 = arith.constant 9 : i32
    %18 = vector.broadcast %c9_i32 : i32 to vector<16x1xi32>
    %19 = arith.cmpi slt, %17, %18 : vector<16x1xi32>
    %cst_7 = arith.constant 0.000000e+00 : f32
    %20 = vector.shape_cast %19 : vector<16x1xi1> to vector<16x1xi1>
    %21 = vector.broadcast %20 : vector<16x1xi1> to vector<16x128xi1>
    %22 = vector.broadcast %cst_7 : f32 to vector<16x128xf32>
    %23 = arith.select %21, %13, %22 : vector<16x128xi1>, vector<16x128xf32>
    %c0_8 = arith.constant 0 : index
    %c0_9 = arith.constant 0 : index
    %24 = vector.load %arg8[%c0_8, %c0_9] : memref<1x128xf32, #tpu.memory_space<vmem>>, vector<1x128xf32>
    %cst_10 = arith.constant dense<0.000000e+00> : vector<128xf32>
    %25 = vector.multi_reduction <add>, %23, %cst_10 [0] : vector<16x128xf32> to vector<128xf32>
    %26 = vector.shape_cast %25 : vector<128xf32> to vector<1x128xf32>
    %27 = arith.addf %24, %26 : vector<1x128xf32>
    %c0_11 = arith.constant 0 : index
    %c0_12 = arith.constant 0 : index
    %28 = vector.load %arg8[%c0_11, %c0_12] : memref<1x128xf32, #tpu.memory_space<vmem>>, vector<1x128xf32>
    tpu.vector_store %arg8[%c0_11, %c0_12], %27 {strides = array<i32>} : memref<1x128xf32, #tpu.memory_space<vmem>>, vector<1x128xf32>,
    %c0_i32_13 = arith.constant 0 : i32
    %29 = arith.cmpi eq, %arg1, %c0_i32_13 : i32
    %30 = arith.extui %29 : i1 to i32
    %c0_i32_14 = arith.constant 0 : i32
    %31 = arith.cmpi ne, %30, %c0_i32_14 : i32
    scf.if %31 {
      %c0_15 = arith.constant 0 : index
      %c0_16 = arith.constant 0 : index
      %32 = vector.load %arg8[%c0_15, %c0_16] : memref<1x128xf32, #tpu.memory_space<vmem>>, vector<1x128xf32>
      %cst_17 = arith.constant 0.111111112 : f32
      %33 = vector.broadcast %cst_17 : f32 to vector<1x128xf32>
      %34 = arith.mulf %32, %33 : vector<1x128xf32>
      %35 = arith.truncf %34 : vector<1x128xf32> to vector<1x128xbf16>
      %c0_18 = arith.constant 0 : index
      %c0_19 = arith.constant 0 : index
      %36 = vector.load %arg5[%c0_18, %c0_19] : memref<128x128xbf16, #tpu.memory_space<vmem>>, vector<128x128xbf16>
      %cst_20 = arith.constant dense<0.000000e+00> : vector<1x128xf32>
      %37 = tpu.matmul %35, %36, %cst_20 {dimension_numbers = #tpu.dot_dimension_numbers<[1], [0], [0], [1], [0, 0, 1, 1], [], []>} : vector<1x128xbf16>, vector<128x128xbf16>, vector<1x128xf32> -> vector<1x128xf32>
      %c0_21 = arith.constant 0 : index
      %c0_22 = arith.constant 0 : index
      %38 = vector.load %arg6[%c0_21, %c0_22] : memref<1x128xf32, #tpu.memory_space<vmem>>, vector<1x128xf32>
      %39 = arith.addf %37, %38 : vector<1x128xf32>
      %c0_23 = arith.constant 0 : index
      %c0_24 = arith.constant 0 : index
      %c0_25 = arith.constant 0 : index
      %40 = vector.load %arg7[%c0_23, %c0_24, %c0_25] : memref<1x1x128xf32, #tpu.memory_space<vmem>>, vector<1x1x128xf32>
      %41 = vector.shape_cast %40 : vector<1x1x128xf32> to vector<1x128xf32>
      %42 = vector.shape_cast %39 : vector<1x128xf32> to vector<1x1x128xf32>
      tpu.vector_store %arg7[%c0_23, %c0_24, %c0_25], %42 {strides = array<i32>} : memref<1x1x128xf32, #tpu.memory_space<vmem>>, vector<1x1x128xf32>,
    } else {
    }
    return
  }
  func.func @transform_0(%arg0: i32, %arg1: i32) -> (i32, i32, i32) {
    %c0_i32 = arith.constant 0 : i32
    %c0_i32_0 = arith.constant 0 : i32
    return %arg0, %arg1, %c0_i32 : i32, i32, i32
  }
  func.func @transform_1(%arg0: i32, %arg1: i32) -> (i32, i32) {
    %c0_i32 = arith.constant 0 : i32
    %c0_i32_0 = arith.constant 0 : i32
    %c0_i32_1 = arith.constant 0 : i32
    return %c0_i32, %c0_i32_0 : i32, i32
  }
  func.func @transform_2(%arg0: i32, %arg1: i32) -> (i32, i32) {
    %c0_i32 = arith.constant 0 : i32
    %c0_i32_0 = arith.constant 0 : i32
    %c0_i32_1 = arith.constant 0 : i32
    return %c0_i32, %c0_i32_0 : i32, i32
  }
  func.func @transform_3(%arg0: i32, %arg1: i32) -> (i32, i32) {
    %c0_i32 = arith.constant 0 : i32
    %c0_i32_0 = arith.constant 0 : i32
    %c0_i32_1 = arith.constant 0 : i32
    return %c0_i32, %c0_i32_0 : i32, i32
  }
  func.func @transform_4(%arg0: i32, %arg1: i32) -> (i32, i32) {
    %c0_i32 = arith.constant 0 : i32
    %c0_i32_0 = arith.constant 0 : i32
    %c0_i32_1 = arith.constant 0 : i32
    return %c0_i32, %c0_i32_0 : i32, i32
  }
  func.func @transform_5(%arg0: i32, %arg1: i32) -> (i32, i32, i32) {
    %c0_i32 = arith.constant 0 : i32
    %c0_i32_0 = arith.constant 0 : i32
    %c0_i32_1 = arith.constant 0 : i32
    return %arg0, %c0_i32, %c0_i32_0 : i32, i32, i32
  }
}

</mosaic_0001>

<llo_original>
// kernel: conv_network_forward.3
$region0: #{conv_network_forward.3}
  #allocation0 [shape = 'u32[]', space=smem, size = 0x4, offset = 0x4, fixed_abs, tag = 'smem constant byte address 0x4 - core index']
  #allocation1 [shape = 'u32[144,128]{1,0:T(1,128)}', space=vmem, size = 0x12000, scoped, tag = 'internal scratch']
  %s0 = inlined_call_operand.vmem [shape: bf16[128,32], index: 0, kind: input, shape index: {}]
  %s1 = inlined_call_operand.vmem [shape: bf16[32,128], index: 1, kind: input, shape index: {}]
  %s2 = inlined_call_operand.vmem [shape: bf16[128,128], index: 2, kind: output, shape index: {0}]
  %s3 = inlined_call_operand.vmem [shape: f32[2,2,128], index: 3, kind: output, shape index: {1}]
  %4 = xla_tuple %s2, %s3
  %s5 = sld [smem:[#allocation0]]
  $region49: #{conv_network_forward.3} parent=0
    _
  %s7 = ssub.s32 1, %s5
  %s8 = scalar_select 0, %s7, %s5
  loop: start=0, step=1, limit=4
  $region2: #{conv_network_forward.3} parent=0 // loop_pre_header
    _
  $region3: #{conv_network_forward.3} parent=0 // loop_header
    %s10 = sphi 0, %s14
    %p11 = scmp.ge.s32.totalorder %s10, 4
    %s20 = sphi 0, %s22
    %s23 = sphi 0, %s20
    %s24 = sphi 0, %s23
    %s40 = sphi 0, %s24
    %s44 = sphi 0, %s44
    %s46 = sphi 0, %s44
    %s47 = sphi 0, %s46
    %s61 = sphi 0, %s47
    %s67 = sphi 0, %s69
    %s70 = sphi 0, %s67
    %s71 = sphi 0, %s70
    %s87 = sphi 0, %s71
    %s93 = sphi 0, %s95
    %s96 = sphi 0, %s93
    %s97 = sphi 0, %s96
    %s113 = sphi 0, %s97
  $region4: #{conv_network_forward.3} parent=0 // loop_header_branch
    %13 = sbr.rel (%p11) target = $region8
  $region5: #{conv_network_forward.3} parent=0 // loop_body
    %s15 = ssub.s32 %s10, 1
    %s16 = ssub.s32 %s10, 2
    %s17 = sadd.s32 %s10, 1
    %s18 = ssub.s32 %s10, %s17
    %p19 = scmp.eq.s32.totalorder %s18, 0
    %s21 = sadd.s32 %s20, 1
    %s22 = scalar_select %p19, %s20, %s21
    %p25 = pneg %p19
    %p26 = scmp.eq.s32.totalorder %s10, 1
    %p27 = por %p25, %p26
    %p28 = scmp.ne.s32.totalorder %s20, %s23
    %p29 = scmp.eq.s32.totalorder %s10, 0
    %p30 = por %p28, %p29
    %p31 = scmp.ne.s32.totalorder %s20, %s23
    %p32 = scmp.eq.s32.totalorder %s15, 1
    %p33 = por %p31, %p32
    %p34 = scmp.ne.s32.totalorder %s23, %s24
    %p35 = scmp.eq.s32.totalorder %s15, 0
    %p36 = por %p34, %p35
    %p37 = scmp.ne.s32.totalorder %s23, %s24
    %p38 = scmp.eq.s32.totalorder %s16, 1
    %p39 = por %p37, %p38
    %p41 = scmp.ne.s32.totalorder %s24, %s40
    %p42 = scmp.eq.s32.totalorder %s16, 0
    %p43 = por %p41, %p42
    %s45 = sadd.s32 %s44, 1
    %p48 = scmp.eq.s32.totalorder %s10, 1
    %p49 = scmp.ne.s32.totalorder %s44, %s46
    %p50 = scmp.eq.s32.totalorder %s10, 0
    %p51 = por %p49, %p50
    %p52 = scmp.ne.s32.totalorder %s44, %s46
    %p53 = scmp.eq.s32.totalorder %s15, 1
    %p54 = por %p52, %p53
    %p55 = scmp.ne.s32.totalorder %s46, %s47
    %p56 = scmp.eq.s32.totalorder %s15, 0
    %p57 = por %p55, %p56
    %p58 = scmp.ne.s32.totalorder %s46, %s47
    %p59 = scmp.eq.s32.totalorder %s16, 1
    %p60 = por %p58, %p59
    %p62 = scmp.ne.s32.totalorder %s47, %s61
    %p63 = scmp.eq.s32.totalorder %s16, 0
    %p64 = por %p62, %p63
    %s65 = ssub.s32 %s10, %s17
    %p66 = scmp.eq.s32.totalorder %s65, 0
    %s68 = sadd.s32 %s67, 1
    %s69 = scalar_select %p66, %s67, %s68
    %p72 = pneg %p66
    %p73 = scmp.eq.s32.totalorder %s10, 1
    %p74 = por %p72, %p73
    %p75 = scmp.ne.s32.totalorder %s67, %s70
    %p76 = scmp.eq.s32.totalorder %s10, 0
    %p77 = por %p75, %p76
    %p78 = scmp.ne.s32.totalorder %s67, %s70
    %p79 = scmp.eq.s32.totalorder %s15, 1
    %p80 = por %p78, %p79
    %p81 = scmp.ne.s32.totalorder %s70, %s71
    %p82 = scmp.eq.s32.totalorder %s15, 0
    %p83 = por %p81, %p82
    %p84 = scmp.ne.s32.totalorder %s70, %s71
    %p85 = scmp.eq.s32.totalorder %s16, 1
    %p86 = por %p84, %p85
    %p88 = scmp.ne.s32.totalorder %s71, %s87
    %p89 = scmp.eq.s32.totalorder %s16, 0
    %p90 = por %p88, %p89
    %s91 = ssub.s32 %s10, %s17
    %p92 = scmp.eq.s32.totalorder %s91, 0
    %s94 = sadd.s32 %s93, 1
    %s95 = scalar_select %p92, %s93, %s94
    %p98 = pneg %p92
    %p99 = scmp.eq.s32.totalorder %s10, 1
    %p100 = por %p98, %p99
    %p101 = scmp.ne.s32.totalorder %s93, %s96
    %p102 = scmp.eq.s32.totalorder %s10, 0
    %p103 = por %p101, %p102
    %p104 = scmp.ne.s32.totalorder %s93, %s96
    %p105 = scmp.eq.s32.totalorder %s15, 1
    %p106 = por %p104, %p105
    %p107 = scmp.ne.s32.totalorder %s96, %s97
    %p108 = scmp.eq.s32.totalorder %s15, 0
    %p109 = por %p107, %p108
    %p110 = scmp.ne.s32.totalorder %s96, %s97
    %p111 = scmp.eq.s32.totalorder %s16, 1
    %p112 = por %p110, %p111
    %p114 = scmp.ne.s32.totalorder %s97, %s113
    %p115 = scmp.eq.s32.totalorder %s16, 0
    %p116 = por %p114, %p115
    %p117 = scmp.le.s32.totalorder 1, %s10
    %p118 = scmp.lt.s32.totalorder %s10, 3
    %p119 = pnand %p117, %p118
    %p120 = pneg %p119
    // Predicated region
    $region9: #{conv_network_forward.3} parent=5 // pred_check
      _
    $region10: #{conv_network_forward.3} parent=5 // pred_check_branch
      %122 = sbr.rel (%p119) target = $region12
    $region11: #{conv_network_forward.3} parent=5 // pred_region
      %s123 = ssub.s32 %s10, 1
      // Predicated region
      $region13: #{conv_network_forward.3} parent=11 // pred_check
        %p124 = pneg %p57
      $region14: #{conv_network_forward.3} parent=11 // pred_check_branch
        %126 = sbr.rel (%p124) target = $region16
      $region15: #{conv_network_forward.3} parent=11 // pred_region
        _
      $region16: #{conv_network_forward.3} parent=11 // pred_fallthru
        _
    $region12: #{conv_network_forward.3} parent=5 // pred_fallthru
      _
    %p127 = scmp.lt.s32.totalorder %s10, 2
    // Predicated region
    $region17: #{conv_network_forward.3} parent=5 // pred_check
      %p128 = pneg %p127
    $region18: #{conv_network_forward.3} parent=5 // pred_check_branch
      %130 = sbr.rel (%p128) target = $region20
    $region19: #{conv_network_forward.3} parent=5 // pred_region
      // Predicated region
      $region21: #{conv_network_forward.3} parent=19 // pred_check
        %p131 = pneg %p30
      $region22: #{conv_network_forward.3} parent=19 // pred_check_branch
        %133 = sbr.rel (%p131) target = $region24
      $region23: #{conv_network_forward.3} parent=19 // pred_region
        %s134 = smul.u32 8, %s10
        %p135 = scmp.lt.s32.totalorder %s134, 15
        %s136 = scalar_select %p135, %s134, 15
        %s137 = smul.addr %s136, 4
        %s138 = scalar_lea.vmem %s0, %s137
        %s139 = smul.u32 8, %s10
      $region24: #{conv_network_forward.3} parent=19 // pred_fallthru
        _
    $region20: #{conv_network_forward.3} parent=5 // pred_fallthru
      _
    %p140 = scmp.le.s32.totalorder 1, %s10
    %p141 = scmp.lt.s32.totalorder %s10, 3
    %p142 = pnand %p140, %p141
    %p143 = pneg %p142
    // Predicated region
    $region25: #{conv_network_forward.3} parent=5 // pred_check
      _
    $region26: #{conv_network_forward.3} parent=5 // pred_check_branch
      %145 = sbr.rel (%p142) target = $region28
    $region27: #{conv_network_forward.3} parent=5 // pred_region
      %s146 = ssub.s32 %s10, 1
      %s147 = smul.u32 8, %s15
      %p148 = scmp.lt.s32.totalorder %s147, 15
      %s149 = scalar_select %p148, %s147, 15
      %s150 = smul.addr %s149, 4
      %s151 = scalar_lea.vmem %s0, %s150
      %p152 = pneg %p36
      %p153 = pneg %p33
      %p154 = pneg %p57
      %p155 = pneg %p54
      %p156 = pneg %p83
      %p157 = pneg %p80
      %s158 = smul.u32 8, %s15
      %p159 = scmp.lt.s32.totalorder %s158, 15
      %s160 = scalar_select %p159, %s158, 15
      %s161 = smul.addr %s160, 4
      %s162 = scalar_lea.vmem %s2, %s161
      %p163 = pneg %p109
      %p164 = pneg %p106
      %p165 = scmp.lt.s32.totalorder %s15, 1
      %s166 = scalar_select %p165, %s15, 1
      %s167 = smul.addr %s166, 2
      %s168 = scalar_lea.vmem %s3, %s167
      %s169 = smul.u32 8, %s15
      %p170 = scmp.lt.s32.totalorder %s169, 15
      %s171 = scalar_select %p170, %s169, 15
      %s172 = smul.addr %s171, 4
      %s173 = scalar_lea.vmem %s0, %s172
      %s174 = smul.u32 8, %s15
      %s175 = smul.u32 8, %s15
      %p176 = scmp.lt.s32.totalorder %s175, 15
      %s177 = scalar_select %p176, %s175, 15
      %s178 = smul.addr %s177, 4
      %s179 = scalar_lea.vmem %s2, %s178
      %s180 = smul.u32 8, %s15
      %p181 = scmp.lt.s32.totalorder %s15, 1
      %s182 = scalar_select %p181, %s15, 1
      %s183 = smul.addr %s182, 2
      %s184 = scalar_lea.vmem %s3, %s183
      %v186 = vld [vmem:[%s173] sm:$0xf]
      %v187 = vld [vmem:[%s173 + $0x4] sm:$0xf]
      %v188 = vld [vmem:[%s173 + $0x8] sm:$0xf]
      %v189 = vld [vmem:[%s173 + $0xc] sm:$0xf]
      %v190 = vld [vmem:[%s173 + $0x10] sm:$0xf]
      %v191 = vld [vmem:[%s173 + $0x14] sm:$0xf]
      %v192 = vld [vmem:[%s173 + $0x18] sm:$0xf]
      %v193 = vld [vmem:[%s173 + $0x1c] sm:$0xf]
      %v194 = vld [vmem:[%s1] sm:$0xf]
      %v195 = vld [vmem:[%s1 + $0x4] sm:$0xf]
      %v196 = vld [vmem:[%s1 + $0x8] sm:$0xf]
      %v197 = vld [vmem:[%s1 + $0xc] sm:$0xf]
      %v206 = vunpack.c.l.b16 %v186
      %v207 = vunpack.c.l.b16 %v187
      %v208 = vunpack.c.l.b16 %v188
      %v209 = vunpack.c.l.b16 %v189
      %v210 = vunpack.c.l.b16 %v190
      %v211 = vunpack.c.l.b16 %v191
      %v212 = vunpack.c.l.b16 %v192
      %v213 = vunpack.c.l.b16 %v193
      %v214 = vpack.c.b16 %v207, %v206
      %v215 = vpack.c.b16 %v209, %v208
      %v216 = vpack.c.b16 %v211, %v210
      %v217 = vpack.c.b16 %v213, %v212
      %v222 = vunpack.c.l.b16 %v194
      %v223 = vunpack.c.l.b16 %v195
      %v224 = vunpack.c.l.b16 %v196
      %v225 = vunpack.c.l.b16 %v197
      %v226 = vpack.c.b16 %v223, %v222
      %v227 = vpack.c.b16 %v225, %v224
      %vm230 = vcmask 261120
      %v232 = vsel %vm230, %v214, 0
      %v235 = vsel %vm230, %v215, 0
      %v238 = vsel %vm230, %v216, 0
      %v241 = vsel %vm230, %v217, 0
      %243 = vmatprep.subr.bf16.mxu0 0
      %244 = vmatpush1.bf16.msra.mxu0 %v226
      %245 = vmatprep.subr.bf16.mxu0 0
      %246 = vmatpush1.bf16.msra.mxu0 %v227
      %247 = vmatprep.subr.bf16.mxu0 0
      %248 = vmatpush1.bf16.msra.mxu0 0
      %249 = vmatprep.subr.bf16.mxu0 0
      %250 = vmatpush1.bf16.msra.mxu0 0
      %251 = vmatprep.subr.bf16.mxu0 0
      %252 = vmatpush1.bf16.msra.mxu0 0
      %253 = vmatprep.subr.bf16.mxu0 0
      %254 = vmatpush1.bf16.msra.mxu0 0
      %255 = vmatprep.subr.bf16.mxu0 0
      %256 = vmatpush1.bf16.msra.mxu0 0
      %257 = vmatprep.subr.bf16.mxu0 0
      %258 = vmatpush1.bf16.msra.mxu0 0
      %259 = vmatprep.subr.bf16.mxu0 0
      %260 = vmatpush1.bf16.msra.mxu0 0
      %261 = vmatprep.subr.bf16.mxu0 0
      %262 = vmatpush1.bf16.msra.mxu0 0
      %263 = vmatprep.subr.bf16.mxu0 0
      %264 = vmatpush1.bf16.msra.mxu0 0
      %265 = vmatprep.subr.bf16.mxu0 0
      %266 = vmatpush1.bf16.msra.mxu0 0
      %267 = vmatprep.subr.bf16.mxu0 0
      %268 = vmatpush1.bf16.msra.mxu0 0
      %269 = vmatprep.subr.bf16.mxu0 0
      %270 = vmatpush1.bf16.msra.mxu0 0
      %271 = vmatprep.subr.bf16.mxu0 0
      %272 = vmatpush1.bf16.msra.mxu0 0
      %273 = vmatprep.subr.bf16.mxu0 0
      %274 = vmatpush1.bf16.msra.mxu0 0
      %275 = vmatprep.mubr.bf16.mxu0 0
      %276 = vmatmul.mubr.bf16.gmra.mrb[0].mxu0 %v232
      %v277 = vpop.f32.mrb[0].mxu0
      %v278 = vadd.f32 0.0, %v277
      %v279 = vpop.f32.mrb[0].mxu0
      %v280 = vpop.f32.mrb[0].mxu0
      %v281 = vadd.f32 0.0, %v280
      %v282 = vpop.f32.mrb[0].mxu0
      %283 = vmatprep.mubr.bf16.mxu0 0
      %284 = vmatmul.mubr.bf16.gmra.mrb[0].mxu0 %v235
      %v285 = vpop.f32.mrb[0].mxu0
      %v286 = vadd.f32 0.0, %v285
      %v287 = vpop.f32.mrb[0].mxu0
      %v288 = vpop.f32.mrb[0].mxu0
      %v289 = vadd.f32 0.0, %v288
      %v290 = vpop.f32.mrb[0].mxu0
      %291 = vmatprep.mubr.bf16.mxu0 0
      %292 = vmatmul.mubr.bf16.gmra.mrb[0].mxu0 %v238
      %v293 = vpop.f32.mrb[0].mxu0
      %v294 = vadd.f32 0.0, %v293
      %v295 = vpop.f32.mrb[0].mxu0
      %v296 = vpop.f32.mrb[0].mxu0
      %v297 = vadd.f32 0.0, %v296
      %v298 = vpop.f32.mrb[0].mxu0
      %299 = vmatprep.mubr.bf16.mxu0 0
      %300 = vmatmul.mubr.bf16.gmra.mrb[0].mxu0 %v241
      %v301 = vpop.f32.mrb[0].mxu0
      %v302 = vadd.f32 0.0, %v301
      %v303 = vpop.f32.mrb[0].mxu0
      %v304 = vpop.f32.mrb[0].mxu0
      %v305 = vadd.f32 0.0, %v304
      %v306 = vpop.f32.mrb[0].mxu0
      %307 = vdwg.mxu0
      %v308 = vpack.c.bf16 %v281, %v278
      %v309 = vpack.c.bf16 %v289, %v286
      %v310 = vpack.c.bf16 %v297, %v294
      %v311 = vpack.c.bf16 %v305, %v302
      %v316 = vunpack.c.l.b16 %v308
      %v317 = vunpack.c.h.b16 %v308
      %v318 = vunpack.c.l.b16 %v309
      %v319 = vunpack.c.h.b16 %v309
      %v320 = vunpack.c.l.b16 %v310
      %v321 = vunpack.c.h.b16 %v310
      %v322 = vunpack.c.l.b16 %v311
      %v323 = vunpack.c.h.b16 %v311
      %v324 = vpack.c.b16 %v316, %v316
      %v325 = vpack.c.b16 %v317, %v317
      %v326 = vpack.c.b16 %v318, %v318
      %v327 = vpack.c.b16 %v319, %v319
      %v328 = vpack.c.b16 %v320, %v320
      %v329 = vpack.c.b16 %v321, %v321
      %v330 = vpack.c.b16 %v322, %v322
      %v331 = vpack.c.b16 %v323, %v323
      %340 = vst [vmem:[%s179] sm:$0xf] %v324
      %341 = vst [vmem:[%s179 + $0x4] sm:$0xf] %v325
      %342 = vst [vmem:[%s179 + $0x8] sm:$0xf] %v326
      %343 = vst [vmem:[%s179 + $0xc] sm:$0xf] %v327
      %344 = vst [vmem:[%s179 + $0x10] sm:$0xf] %v328
      %345 = vst [vmem:[%s179 + $0x14] sm:$0xf] %v329
      %346 = vst [vmem:[%s179 + $0x18] sm:$0xf] %v330
      %347 = vst [vmem:[%s179 + $0x1c] sm:$0xf] %v331
      %v348 = vadd.f32 %v278, %v281
      %v349 = vadd.f32 %v348, %v286
      %v350 = vadd.f32 %v349, %v289
      %v351 = vadd.f32 %v350, %v294
      %v352 = vadd.f32 %v351, %v297
      %v353 = vadd.f32 %v352, %v302
      %v354 = vadd.f32 %v353, %v305
      %v355 = vrot.slane %v354, 4
      %v356 = vadd.f32 %v354, %v355
      %v357 = vrot.slane %v356, 2
      %v358 = vadd.f32 %v356, %v357
      %v359 = vrot.slane %v358, 1
      %v360 = vadd.f32 %v358, %v359
      %v361 = vmul.f32 %v278, %v278
      %v362 = vmul.f32 %v281, %v281
      %v363 = vmul.f32 %v286, %v286
      %v364 = vmul.f32 %v289, %v289
      %v365 = vmul.f32 %v294, %v294
      %v366 = vmul.f32 %v297, %v297
      %v367 = vmul.f32 %v302, %v302
      %v368 = vmul.f32 %v305, %v305
      %v369 = vadd.f32 %v361, %v362
      %v370 = vadd.f32 %v369, %v363
      %v371 = vadd.f32 %v370, %v364
      %v372 = vadd.f32 %v371, %v365
      %v373 = vadd.f32 %v372, %v366
      %v374 = vadd.f32 %v373, %v367
      %v375 = vadd.f32 %v374, %v368
      %v376 = vrot.slane %v375, 4
      %v377 = vadd.f32 %v375, %v376
      %v378 = vrot.slane %v377, 2
      %v379 = vadd.f32 %v377, %v378
      %v380 = vrot.slane %v379, 1
      %v381 = vadd.f32 %v379, %v380
      %v382 = vlaneseq
      %v383 = vshrl.u32 %v382, 7
      %vm384 = vcmp.eq.s32.totalorder %v383, 0
      %v385 = vsel %vm384, 1, 0
      %vm386 = vcmp.eq.s32.totalorder %v385, 1
      %v387 = vsel %vm386, %v360, %v381
      %388 = vst [vmem:[%s184] sm:$0x3] %v387
      %s389 = smul.u32 8, %s15
      %p390 = scmp.lt.s32.totalorder %s389, 15
      %s391 = scalar_select %p390, %s389, 15
      %s392 = smul.addr %s391, 4
      %s393 = scalar_lea.vmem %s2, %s392
      %p394 = scmp.lt.s32.totalorder %s15, 1
      %s395 = scalar_select %p394, %s15, 1
      %s396 = smul.addr %s395, 2
      %s397 = scalar_lea.vmem %s3, %s396
      // Predicated region
      $region29: #{conv_network_forward.3} parent=27 // pred_check
        %p398 = pneg %p80
      $region30: #{conv_network_forward.3} parent=27 // pred_check_branch
        %400 = sbr.rel (%p398) target = $region32
      $region31: #{conv_network_forward.3} parent=27 // pred_region
        %s401 = smul.u32 8, %s15
      $region32: #{conv_network_forward.3} parent=27 // pred_fallthru
        _
      // Predicated region
      $region33: #{conv_network_forward.3} parent=27 // pred_check
        %p402 = pneg %p106
      $region34: #{conv_network_forward.3} parent=27 // pred_check_branch
        %404 = sbr.rel (%p402) target = $region36
      $region35: #{conv_network_forward.3} parent=27 // pred_region
        _
      $region36: #{conv_network_forward.3} parent=27 // pred_fallthru
        _
    $region28: #{conv_network_forward.3} parent=5 // pred_fallthru
      _
    %p405 = scmp.le.s32.totalorder 2, %s10
    // Predicated region
    $region37: #{conv_network_forward.3} parent=5 // pred_check
      %p406 = pneg %p405
    $region38: #{conv_network_forward.3} parent=5 // pred_check_branch
      %408 = sbr.rel (%p406) target = $region40
    $region39: #{conv_network_forward.3} parent=5 // pred_region
      %s409 = ssub.s32 %s10, 2
      // Predicated region
      $region41: #{conv_network_forward.3} parent=39 // pred_check
        %p410 = pneg %p86
      $region42: #{conv_network_forward.3} parent=39 // pred_check_branch
        %412 = sbr.rel (%p410) target = $region44
      $region43: #{conv_network_forward.3} parent=39 // pred_region
        %s413 = smul.u32 8, %s16
        %p414 = scmp.lt.s32.totalorder %s413, 15
        %s415 = scalar_select %p414, %s413, 15
        %s416 = smul.addr %s415, 4
        %s417 = scalar_lea.vmem %s2, %s416
      $region44: #{conv_network_forward.3} parent=39 // pred_fallthru
        _
      // Predicated region
      $region45: #{conv_network_forward.3} parent=39 // pred_check
        %p418 = pneg %p112
      $region46: #{conv_network_forward.3} parent=39 // pred_check_branch
        %420 = sbr.rel (%p418) target = $region48
      $region47: #{conv_network_forward.3} parent=39 // pred_region
        %p421 = scmp.lt.s32.totalorder %s16, 1
        %s422 = scalar_select %p421, %s16, 1
        %s423 = smul.addr %s422, 2
        %s424 = scalar_lea.vmem %s3, %s423
      $region48: #{conv_network_forward.3} parent=39 // pred_fallthru
        _
    $region40: #{conv_network_forward.3} parent=5 // pred_fallthru
      _
  $region6: #{conv_network_forward.3} parent=0 // loop_footer
    %s14 = sadd.s32 1, %s10
  $region7: #{conv_network_forward.3} parent=0 // loop_footer_branch
    %9 = sbr.rel target = $region3
  $region8: #{conv_network_forward.3} parent=0 // loop_exit
    _

// kernel: conv_network_forward.4
$region0: #{conv_network_forward.4}
  #allocation0 [shape = 'u32[]', space=smem, size = 0x4, offset = 0x4, fixed_abs, tag = 'smem constant byte address 0x4 - core index']
  #allocation1 [shape = 'u32[144,128]{1,0:T(1,128)}', space=vmem, size = 0x12000, scoped, tag = 'internal scratch']
  %s0 = inlined_call_operand.vmem [shape: bf16[32,1152], index: 0, kind: input, shape index: {}]
  %s1 = inlined_call_operand.vmem [shape: f32[1,1152], index: 1, kind: input, shape index: {}]
  %s2 = inlined_call_operand.vmem [shape: f32[1,1152], index: 2, kind: input, shape index: {}]
  %s3 = inlined_call_operand.vmem [shape: bf16[1152,128], index: 3, kind: input, shape index: {}]
  %s4 = inlined_call_operand.vmem [shape: bf16[32,128], index: 4, kind: output, shape index: {0}]
  %s5 = inlined_call_operand.vmem [shape: f32[2,2,128], index: 5, kind: output, shape index: {1}]
  %6 = xla_tuple %s4, %s5
  %s7 = sld [smem:[#allocation0]]
  $region57: #{conv_network_forward.4} parent=0
    _
  %s9 = ssub.s32 1, %s7
  %s10 = scalar_select 0, %s9, %s7
  loop: start=0, step=1, limit=4
  $region2: #{conv_network_forward.4} parent=0 // loop_pre_header
    _
  $region3: #{conv_network_forward.4} parent=0 // loop_header
    %s12 = sphi 0, %s16
    %p13 = scmp.ge.s32.totalorder %s12, 4
    %s22 = sphi 0, %s24
    %s25 = sphi 0, %s22
    %s26 = sphi 0, %s25
    %s42 = sphi 0, %s26
    %s46 = sphi 0, %s46
    %s48 = sphi 0, %s46
    %s49 = sphi 0, %s48
    %s63 = sphi 0, %s49
    %s67 = sphi 0, %s67
    %s69 = sphi 0, %s67
    %s70 = sphi 0, %s69
    %s84 = sphi 0, %s70
    %s88 = sphi 0, %s88
    %s90 = sphi 0, %s88
    %s91 = sphi 0, %s90
    %s105 = sphi 0, %s91
    %s111 = sphi 0, %s113
    %s114 = sphi 0, %s111
    %s115 = sphi 0, %s114
    %s131 = sphi 0, %s115
    %s137 = sphi 0, %s139
    %s140 = sphi 0, %s137
    %s141 = sphi 0, %s140
    %s157 = sphi 0, %s141
  $region4: #{conv_network_forward.4} parent=0 // loop_header_branch
    %15 = sbr.rel (%p13) target = $region8
  $region5: #{conv_network_forward.4} parent=0 // loop_body
    %s17 = ssub.s32 %s12, 1
    %s18 = ssub.s32 %s12, 2
    %s19 = sadd.s32 %s12, 1
    %s20 = ssub.s32 %s12, %s19
    %p21 = scmp.eq.s32.totalorder %s20, 0
    %s23 = sadd.s32 %s22, 1
    %s24 = scalar_select %p21, %s22, %s23
    %p27 = pneg %p21
    %p28 = scmp.eq.s32.totalorder %s12, 1
    %p29 = por %p27, %p28
    %p30 = scmp.ne.s32.totalorder %s22, %s25
    %p31 = scmp.eq.s32.totalorder %s12, 0
    %p32 = por %p30, %p31
    %p33 = scmp.ne.s32.totalorder %s22, %s25
    %p34 = scmp.eq.s32.totalorder %s17, 1
    %p35 = por %p33, %p34
    %p36 = scmp.ne.s32.totalorder %s25, %s26
    %p37 = scmp.eq.s32.totalorder %s17, 0
    %p38 = por %p36, %p37
    %p39 = scmp.ne.s32.totalorder %s25, %s26
    %p40 = scmp.eq.s32.totalorder %s18, 1
    %p41 = por %p39, %p40
    %p43 = scmp.ne.s32.totalorder %s26, %s42
    %p44 = scmp.eq.s32.totalorder %s18, 0
    %p45 = por %p43, %p44
    %s47 = sadd.s32 %s46, 1
    %p50 = scmp.eq.s32.totalorder %s12, 1
    %p51 = scmp.ne.s32.totalorder %s46, %s48
    %p52 = scmp.eq.s32.totalorder %s12, 0
    %p53 = por %p51, %p52
    %p54 = scmp.ne.s32.totalorder %s46, %s48
    %p55 = scmp.eq.s32.totalorder %s17, 1
    %p56 = por %p54, %p55
    %p57 = scmp.ne.s32.totalorder %s48, %s49
    %p58 = scmp.eq.s32.totalorder %s17, 0
    %p59 = por %p57, %p58
    %p60 = scmp.ne.s32.totalorder %s48, %s49
    %p61 = scmp.eq.s32.totalorder %s18, 1
    %p62 = por %p60, %p61
    %p64 = scmp.ne.s32.totalorder %s49, %s63
    %p65 = scmp.eq.s32.totalorder %s18, 0
    %p66 = por %p64, %p65
    %s68 = sadd.s32 %s67, 1
    %p71 = scmp.eq.s32.totalorder %s12, 1
    %p72 = scmp.ne.s32.totalorder %s67, %s69
    %p73 = scmp.eq.s32.totalorder %s12, 0
    %p74 = por %p72, %p73
    %p75 = scmp.ne.s32.totalorder %s67, %s69
    %p76 = scmp.eq.s32.totalorder %s17, 1
    %p77 = por %p75, %p76
    %p78 = scmp.ne.s32.totalorder %s69, %s70
    %p79 = scmp.eq.s32.totalorder %s17, 0
    %p80 = por %p78, %p79
    %p81 = scmp.ne.s32.totalorder %s69, %s70
    %p82 = scmp.eq.s32.totalorder %s18, 1
    %p83 = por %p81, %p82
    %p85 = scmp.ne.s32.totalorder %s70, %s84
    %p86 = scmp.eq.s32.totalorder %s18, 0
    %p87 = por %p85, %p86
    %s89 = sadd.s32 %s88, 1
    %p92 = scmp.eq.s32.totalorder %s12, 1
    %p93 = scmp.ne.s32.totalorder %s88, %s90
    %p94 = scmp.eq.s32.totalorder %s12, 0
    %p95 = por %p93, %p94
    %p96 = scmp.ne.s32.totalorder %s88, %s90
    %p97 = scmp.eq.s32.totalorder %s17, 1
    %p98 = por %p96, %p97
    %p99 = scmp.ne.s32.totalorder %s90, %s91
    %p100 = scmp.eq.s32.totalorder %s17, 0
    %p101 = por %p99, %p100
    %p102 = scmp.ne.s32.totalorder %s90, %s91
    %p103 = scmp.eq.s32.totalorder %s18, 1
    %p104 = por %p102, %p103
    %p106 = scmp.ne.s32.totalorder %s91, %s105
    %p107 = scmp.eq.s32.totalorder %s18, 0
    %p108 = por %p106, %p107
    %s109 = ssub.s32 %s12, %s19
    %p110 = scmp.eq.s32.totalorder %s109, 0
    %s112 = sadd.s32 %s111, 1
    %s113 = scalar_select %p110, %s111, %s112
    %p116 = pneg %p110
    %p117 = scmp.eq.s32.totalorder %s12, 1
    %p118 = por %p116, %p117
    %p119 = scmp.ne.s32.totalorder %s111, %s114
    %p120 = scmp.eq.s32.totalorder %s12, 0
    %p121 = por %p119, %p120
    %p122 = scmp.ne.s32.totalorder %s111, %s114
    %p123 = scmp.eq.s32.totalorder %s17, 1
    %p124 = por %p122, %p123
    %p125 = scmp.ne.s32.totalorder %s114, %s115
    %p126 = scmp.eq.s32.totalorder %s17, 0
    %p127 = por %p125, %p126
    %p128 = scmp.ne.s32.totalorder %s114, %s115
    %p129 = scmp.eq.s32.totalorder %s18, 1
    %p130 = por %p128, %p129
    %p132 = scmp.ne.s32.totalorder %s115, %s131
    %p133 = scmp.eq.s32.totalorder %s18, 0
    %p134 = por %p132, %p133
    %s135 = ssub.s32 %s12, %s19
    %p136 = scmp.eq.s32.totalorder %s135, 0
    %s138 = sadd.s32 %s137, 1
    %s139 = scalar_select %p136, %s137, %s138
    %p142 = pneg %p136
    %p143 = scmp.eq.s32.totalorder %s12, 1
    %p144 = por %p142, %p143
    %p145 = scmp.ne.s32.totalorder %s137, %s140
    %p146 = scmp.eq.s32.totalorder %s12, 0
    %p147 = por %p145, %p146
    %p148 = scmp.ne.s32.totalorder %s137, %s140
    %p149 = scmp.eq.s32.totalorder %s17, 1
    %p150 = por %p148, %p149
    %p151 = scmp.ne.s32.totalorder %s140, %s141
    %p152 = scmp.eq.s32.totalorder %s17, 0
    %p153 = por %p151, %p152
    %p154 = scmp.ne.s32.totalorder %s140, %s141
    %p155 = scmp.eq.s32.totalorder %s18, 1
    %p156 = por %p154, %p155
    %p158 = scmp.ne.s32.totalorder %s141, %s157
    %p159 = scmp.eq.s32.totalorder %s18, 0
    %p160 = por %p158, %p159
    %p161 = scmp.le.s32.totalorder 1, %s12
    %p162 = scmp.lt.s32.totalorder %s12, 3
    %p163 = pnand %p161, %p162
    %p164 = pneg %p163
    // Predicated region
    $region9: #{conv_network_forward.4} parent=5 // pred_check
      _
    $region10: #{conv_network_forward.4} parent=5 // pred_check_branch
      %166 = sbr.rel (%p163) target = $region12
    $region11: #{conv_network_forward.4} parent=5 // pred_region
      %s167 = ssub.s32 %s12, 1
      // Predicated region
      $region13: #{conv_network_forward.4} parent=11 // pred_check
        %p168 = pneg %p59
      $region14: #{conv_network_forward.4} parent=11 // pred_check_branch
        %170 = sbr.rel (%p168) target = $region16
      $region15: #{conv_network_forward.4} parent=11 // pred_region
        _
      $region16: #{conv_network_forward.4} parent=11 // pred_fallthru
        _
      // Predicated region
      $region17: #{conv_network_forward.4} parent=11 // pred_check
        %p171 = pneg %p80
      $region18: #{conv_network_forward.4} parent=11 // pred_check_branch
        %173 = sbr.rel (%p171) target = $region20
      $region19: #{conv_network_forward.4} parent=11 // pred_region
        _
      $region20: #{conv_network_forward.4} parent=11 // pred_fallthru
        _
      // Predicated region
      $region21: #{conv_network_forward.4} parent=11 // pred_check
        %p174 = pneg %p101
      $region22: #{conv_network_forward.4} parent=11 // pred_check_branch
        %176 = sbr.rel (%p174) target = $region24
      $region23: #{conv_network_forward.4} parent=11 // pred_region
        _
      $region24: #{conv_network_forward.4} parent=11 // pred_fallthru
        _
    $region12: #{conv_network_forward.4} parent=5 // pred_fallthru
      _
    %p177 = scmp.lt.s32.totalorder %s12, 2
    // Predicated region
    $region25: #{conv_network_forward.4} parent=5 // pred_check
      %p178 = pneg %p177
    $region26: #{conv_network_forward.4} parent=5 // pred_check_branch
      %180 = sbr.rel (%p178) target = $region28
    $region27: #{conv_network_forward.4} parent=5 // pred_region
      // Predicated region
      $region29: #{conv_network_forward.4} parent=27 // pred_check
        %p181 = pneg %p32
      $region30: #{conv_network_forward.4} parent=27 // pred_check_branch
        %183 = sbr.rel (%p181) target = $region32
      $region31: #{conv_network_forward.4} parent=27 // pred_region
        %s184 = smul.u32 2, %s12
        %p185 = scmp.lt.s32.totalorder %s184, 3
        %s186 = scalar_select %p185, %s184, 3
        %s187 = smul.addr %s186, 9
        %s188 = smul.addr %s187, 4
        %s189 = scalar_lea.vmem %s0, %s188
        %s190 = smul.u32 2, %s12
      $region32: #{conv_network_forward.4} parent=27 // pred_fallthru
        _
    $region28: #{conv_network_forward.4} parent=5 // pred_fallthru
      _
    %p191 = scmp.le.s32.totalorder 1, %s12
    %p192 = scmp.lt.s32.totalorder %s12, 3
    %p193 = pnand %p191, %p192
    %p194 = pneg %p193
    // Predicated region
    $region33: #{conv_network_forward.4} parent=5 // pred_check
      _
    $region34: #{conv_network_forward.4} parent=5 // pred_check_branch
      %196 = sbr.rel (%p193) target = $region36
    $region35: #{conv_network_forward.4} parent=5 // pred_region
      %s197 = ssub.s32 %s12, 1
      %s198 = smul.u32 2, %s17
      %p199 = scmp.lt.s32.totalorder %s198, 3
      %s200 = scalar_select %p199, %s198, 3
      %s201 = smul.addr %s200, 9
      %s202 = smul.addr %s201, 4
      %s203 = scalar_lea.vmem %s0, %s202
      %p204 = pneg %p38
      %p205 = pneg %p35
      %p206 = pneg %p59
      %p207 = pneg %p56
      %p208 = pneg %p80
      %p209 = pneg %p77
      %p210 = pneg %p101
      %p211 = pneg %p98
      %p212 = pneg %p127
      %p213 = pneg %p124
      %s214 = smul.u32 2, %s17
      %p215 = scmp.lt.s32.totalorder %s214, 3
      %s216 = scalar_select %p215, %s214, 3
      %s217 = smul.addr %s216, 4
      %s218 = scalar_lea.vmem %s4, %s217
      %p219 = pneg %p153
      %p220 = pneg %p150
      %p221 = scmp.lt.s32.totalorder %s17, 1
      %s222 = scalar_select %p221, %s17, 1
      %s223 = smul.addr %s222, 2
      %s224 = scalar_lea.vmem %s5, %s223
      %s225 = smul.u32 2, %s17
      %p226 = scmp.lt.s32.totalorder %s225, 3
      %s227 = scalar_select %p226, %s225, 3
      %s228 = smul.addr %s227, 9
      %s229 = smul.addr %s228, 4
      %s230 = scalar_lea.vmem %s0, %s229
      %s231 = smul.u32 2, %s17
      %s232 = smul.u32 2, %s17
      %p233 = scmp.lt.s32.totalorder %s232, 3
      %s234 = scalar_select %p233, %s232, 3
      %s235 = smul.addr %s234, 4
      %s236 = scalar_lea.vmem %s4, %s235
      %s237 = smul.u32 2, %s17
      %p238 = scmp.lt.s32.totalorder %s17, 1
      %s239 = scalar_select %p238, %s17, 1
      %s240 = smul.addr %s239, 2
      %s241 = scalar_lea.vmem %s5, %s240
      %v243 = vld [vmem:[%s230] sm:$0xff]
      %v244 = vld [vmem:[%s230 + $0x8] sm:$0xff]
      %v245 = vld [vmem:[%s230 + $0x10] sm:$0xff]
      %v246 = vld [vmem:[%s230 + $0x18] sm:$0xff]
      %v247 = vld [vmem:[%s230 + $0x20] sm:$0xf]
      %v248 = vld [vmem:[%s230 + $0x24] sm:$0xff]
      %v249 = vld [vmem:[%s230 + $0x2c] sm:$0xff]
      %v250 = vld [vmem:[%s230 + $0x34] sm:$0xff]
      %v251 = vld [vmem:[%s230 + $0x3c] sm:$0xff]
      %v252 = vld [vmem:[%s230 + $0x44] sm:$0xf]
      %v253 = vunpack.c.l.bf16 %v243
      %v254 = vunpack.c.h.bf16 %v243
      %v255 = vunpack.c.l.bf16 %v244
      %v256 = vunpack.c.h.bf16 %v244
      %v257 = vunpack.c.l.bf16 %v245
      %v258 = vunpack.c.h.bf16 %v245
      %v259 = vunpack.c.l.bf16 %v246
      %v260 = vunpack.c.h.bf16 %v246
      %v261 = vunpack.c.l.bf16 %v247
      %v262 = vunpack.c.l.bf16 %v248
      %v263 = vunpack.c.h.bf16 %v248
      %v264 = vunpack.c.l.bf16 %v249
      %v265 = vunpack.c.h.bf16 %v249
      %v266 = vunpack.c.l.bf16 %v250
      %v267 = vunpack.c.h.bf16 %v250
      %v268 = vunpack.c.l.bf16 %v251
      %v269 = vunpack.c.h.bf16 %v251
      %v270 = vunpack.c.l.bf16 %v252
      %v271 = vld [vmem:[%s1] sm:$0xff]
      %v272 = vld [vmem:[%s1 + $0x8] sm:$0x1]
      %v275 = vlaneseq
      %v276 = vshrl.u32 %v275, 7
      %v277 = vsub.s32 0, %v276
      %v278 = vrot.slane %v271, %v277
      %v279 = vlaneseq
      %v280 = vshrl.u32 %v279, 7
      %v281 = vsub.s32 1, %v280
      %v282 = vrot.slane %v271, %v281
      %v283 = vlaneseq
      %v284 = vshrl.u32 %v283, 7
      %v285 = vsub.s32 2, %v284
      %v286 = vrot.slane %v271, %v285
      %v287 = vlaneseq
      %v288 = vshrl.u32 %v287, 7
      %v289 = vsub.s32 3, %v288
      %v290 = vrot.slane %v271, %v289
      %v291 = vlaneseq
      %v292 = vshrl.u32 %v291, 7
      %v293 = vsub.s32 4, %v292
      %v294 = vrot.slane %v271, %v293
      %v295 = vlaneseq
      %v296 = vshrl.u32 %v295, 7
      %v297 = vsub.s32 5, %v296
      %v298 = vrot.slane %v271, %v297
      %v299 = vlaneseq
      %v300 = vshrl.u32 %v299, 7
      %v301 = vsub.s32 6, %v300
      %v302 = vrot.slane %v271, %v301
      %v303 = vlaneseq
      %v304 = vshrl.u32 %v303, 7
      %v305 = vsub.s32 7, %v304
      %v306 = vrot.slane %v271, %v305
      %v307 = vlaneseq
      %v308 = vshrl.u32 %v307, 7
      %v309 = vsub.s32 0, %v308
      %v310 = vrot.slane %v272, %v309
      %v320 = vmul.f32 %v253, %v278
      %v321 = vmul.f32 %v254, %v282
      %v322 = vmul.f32 %v255, %v286
      %v323 = vmul.f32 %v256, %v290
      %v324 = vmul.f32 %v257, %v294
      %v325 = vmul.f32 %v258, %v298
      %v326 = vmul.f32 %v259, %v302
      %v327 = vmul.f32 %v260, %v306
      %v328 = vmul.f32 %v261, %v310
      %v329 = vmul.f32 %v262, %v278
      %v330 = vmul.f32 %v263, %v282
      %v331 = vmul.f32 %v264, %v286
      %v332 = vmul.f32 %v265, %v290
      %v333 = vmul.f32 %v266, %v294
      %v334 = vmul.f32 %v267, %v298
      %v335 = vmul.f32 %v268, %v302
      %v336 = vmul.f32 %v269, %v306
      %v337 = vmul.f32 %v270, %v310
      %v338 = vld [vmem:[%s2] sm:$0xff]
      %v339 = vld [vmem:[%s2 + $0x8] sm:$0x1]
      %v342 = vlaneseq
      %v343 = vshrl.u32 %v342, 7
      %v344 = vsub.s32 0, %v343
      %v345 = vrot.slane %v338, %v344
      %v346 = vlaneseq
      %v347 = vshrl.u32 %v346, 7
      %v348 = vsub.s32 1, %v347
      %v349 = vrot.slane %v338, %v348
      %v350 = vlaneseq
      %v351 = vshrl.u32 %v350, 7
      %v352 = vsub.s32 2, %v351
      %v353 = vrot.slane %v338, %v352
      %v354 = vlaneseq
      %v355 = vshrl.u32 %v354, 7
      %v356 = vsub.s32 3, %v355
      %v357 = vrot.slane %v338, %v356
      %v358 = vlaneseq
      %v359 = vshrl.u32 %v358, 7
      %v360 = vsub.s32 4, %v359
      %v361 = vrot.slane %v338, %v360
      %v362 = vlaneseq
      %v363 = vshrl.u32 %v362, 7
      %v364 = vsub.s32 5, %v363
      %v365 = vrot.slane %v338, %v364
      %v366 = vlaneseq
      %v367 = vshrl.u32 %v366, 7
      %v368 = vsub.s32 6, %v367
      %v369 = vrot.slane %v338, %v368
      %v370 = vlaneseq
      %v371 = vshrl.u32 %v370, 7
      %v372 = vsub.s32 7, %v371
      %v373 = vrot.slane %v338, %v372
      %v374 = vlaneseq
      %v375 = vshrl.u32 %v374, 7
      %v376 = vsub.s32 0, %v375
      %v377 = vrot.slane %v339, %v376
      %v387 = vadd.f32 %v320, %v345
      %v388 = vadd.f32 %v321, %v349
      %v389 = vadd.f32 %v322, %v353
      %v390 = vadd.f32 %v323, %v357
      %v391 = vadd.f32 %v324, %v361
      %v392 = vadd.f32 %v325, %v365
      %v393 = vadd.f32 %v326, %v369
      %v394 = vadd.f32 %v327, %v373
      %v395 = vadd.f32 %v328, %v377
      %v396 = vadd.f32 %v329, %v345
      %v397 = vadd.f32 %v330, %v349
      %v398 = vadd.f32 %v331, %v353
      %v399 = vadd.f32 %v332, %v357
      %v400 = vadd.f32 %v333, %v361
      %v401 = vadd.f32 %v334, %v365
      %v402 = vadd.f32 %v335, %v369
      %v403 = vadd.f32 %v336, %v373
      %v404 = vadd.f32 %v337, %v377
      %v405 = vmax.f32 %v387, 0.0
      %v406 = vmax.f32 %v388, 0.0
      %v407 = vmax.f32 %v389, 0.0
      %v408 = vmax.f32 %v390, 0.0
      %v409 = vmax.f32 %v391, 0.0
      %v410 = vmax.f32 %v392, 0.0
      %v411 = vmax.f32 %v393, 0.0
      %v412 = vmax.f32 %v394, 0.0
      %v413 = vmax.f32 %v395, 0.0
      %v414 = vmax.f32 %v396, 0.0
      %v415 = vmax.f32 %v397, 0.0
      %v416 = vmax.f32 %v398, 0.0
      %v417 = vmax.f32 %v399, 0.0
      %v418 = vmax.f32 %v400, 0.0
      %v419 = vmax.f32 %v401, 0.0
      %v420 = vmax.f32 %v402, 0.0
      %v421 = vmax.f32 %v403, 0.0
      %v422 = vmax.f32 %v404, 0.0
      %v423 = vpack.c.bf16 %v414, %v405
      %v424 = vpack.c.bf16 %v415, %v406
      %v425 = vpack.c.bf16 %v416, %v407
      %v426 = vpack.c.bf16 %v417, %v408
      %v427 = vpack.c.bf16 %v418, %v409
      %v428 = vpack.c.bf16 %v419, %v410
      %v429 = vpack.c.bf16 %v420, %v411
      %v430 = vpack.c.bf16 %v421, %v412
      %v431 = vpack.c.bf16 %v422, %v413
      %v432 = vld [vmem:[%s3] sm:$0xf]
      %v433 = vld [vmem:[%s3 + $0x4] sm:$0xf]
      %v434 = vld [vmem:[%s3 + $0x8] sm:$0xf]
      %v435 = vld [vmem:[%s3 + $0xc] sm:$0xf]
      %v436 = vld [vmem:[%s3 + $0x10] sm:$0xf]
      %v437 = vld [vmem:[%s3 + $0x14] sm:$0xf]
      %v438 = vld [vmem:[%s3 + $0x18] sm:$0xf]
      %v439 = vld [vmem:[%s3 + $0x1c] sm:$0xf]
      %v440 = vld [vmem:[%s3 + $0x20] sm:$0xf]
      %v441 = vld [vmem:[%s3 + $0x24] sm:$0xf]
      %v442 = vld [vmem:[%s3 + $0x28] sm:$0xf]
      %v443 = vld [vmem:[%s3 + $0x2c] sm:$0xf]
      %v444 = vld [vmem:[%s3 + $0x30] sm:$0xf]
      %v445 = vld [vmem:[%s3 + $0x34] sm:$0xf]
      %v446 = vld [vmem:[%s3 + $0x38] sm:$0xf]
      %v447 = vld [vmem:[%s3 + $0x3c] sm:$0xf]
      %v448 = vld [vmem:[%s3 + $0x40] sm:$0xf]
      %v449 = vld [vmem:[%s3 + $0x44] sm:$0xf]
      %v450 = vld [vmem:[%s3 + $0x48] sm:$0xf]
      %v451 = vld [vmem:[%s3 + $0x4c] sm:$0xf]
      %v452 = vld [vmem:[%s3 + $0x50] sm:$0xf]
      %v453 = vld [vmem:[%s3 + $0x54] sm:$0xf]
      %v454 = vld [vmem:[%s3 + $0x58] sm:$0xf]
      %v455 = vld [vmem:[%s3 + $0x5c] sm:$0xf]
      %v456 = vld [vmem:[%s3 + $0x60] sm:$0xf]
      %v457 = vld [vmem:[%s3 + $0x64] sm:$0xf]
      %v458 = vld [vmem:[%s3 + $0x68] sm:$0xf]
      %v459 = vld [vmem:[%s3 + $0x6c] sm:$0xf]
      %v460 = vld [vmem:[%s3 + $0x70] sm:$0xf]
      %v461 = vld [vmem:[%s3 + $0x74] sm:$0xf]
      %v462 = vld [vmem:[%s3 + $0x78] sm:$0xf]
      %v463 = vld [vmem:[%s3 + $0x7c] sm:$0xf]
      %v464 = vld [vmem:[%s3 + $0x80] sm:$0xf]
      %v465 = vld [vmem:[%s3 + $0x84] sm:$0xf]
      %v466 = vld [vmem:[%s3 + $0x88] sm:$0xf]
      %v467 = vld [vmem:[%s3 + $0x8c] sm:$0xf]
      %v468 = vld [vmem:[%s3 + $0x90] sm:$0xf]
      %v469 = vld [vmem:[%s3 + $0x94] sm:$0xf]
      %v470 = vld [vmem:[%s3 + $0x98] sm:$0xf]
      %v471 = vld [vmem:[%s3 + $0x9c] sm:$0xf]
      %v472 = vld [vmem:[%s3 + $0xa0] sm:$0xf]
      %v473 = vld [vmem:[%s3 + $0xa4] sm:$0xf]
      %v474 = vld [vmem:[%s3 + $0xa8] sm:$0xf]
      %v475 = vld [vmem:[%s3 + $0xac] sm:$0xf]
      %v476 = vld [vmem:[%s3 + $0xb0] sm:$0xf]
      %v477 = vld [vmem:[%s3 + $0xb4] sm:$0xf]
      %v478 = vld [vmem:[%s3 + $0xb8] sm:$0xf]
      %v479 = vld [vmem:[%s3 + $0xbc] sm:$0xf]
      %v480 = vld [vmem:[%s3 + $0xc0] sm:$0xf]
      %v481 = vld [vmem:[%s3 + $0xc4] sm:$0xf]
      %v482 = vld [vmem:[%s3 + $0xc8] sm:$0xf]
      %v483 = vld [vmem:[%s3 + $0xcc] sm:$0xf]
      %v484 = vld [vmem:[%s3 + $0xd0] sm:$0xf]
      %v485 = vld [vmem:[%s3 + $0xd4] sm:$0xf]
      %v486 = vld [vmem:[%s3 + $0xd8] sm:$0xf]
      %v487 = vld [vmem:[%s3 + $0xdc] sm:$0xf]
      %v488 = vld [vmem:[%s3 + $0xe0] sm:$0xf]
      %v489 = vld [vmem:[%s3 + $0xe4] sm:$0xf]
      %v490 = vld [vmem:[%s3 + $0xe8] sm:$0xf]
      %v491 = vld [vmem:[%s3 + $0xec] sm:$0xf]
      %v492 = vld [vmem:[%s3 + $0xf0] sm:$0xf]
      %v493 = vld [vmem:[%s3 + $0xf4] sm:$0xf]
      %v494 = vld [vmem:[%s3 + $0xf8] sm:$0xf]
      %v495 = vld [vmem:[%s3 + $0xfc] sm:$0xf]
      %v496 = vld [vmem:[%s3 + $0x100] sm:$0xf]
      %v497 = vld [vmem:[%s3 + $0x104] sm:$0xf]
      %v498 = vld [vmem:[%s3 + $0x108] sm:$0xf]
      %v499 = vld [vmem:[%s3 + $0x10c] sm:$0xf]
      %v500 = vld [vmem:[%s3 + $0x110] sm:$0xf]
      %v501 = vld [vmem:[%s3 + $0x114] sm:$0xf]
      %v502 = vld [vmem:[%s3 + $0x118] sm:$0xf]
      %v503 = vld [vmem:[%s3 + $0x11c] sm:$0xf]
      %v504 = vld [vmem:[%s3 + $0x120] sm:$0xf]
      %v505 = vld [vmem:[%s3 + $0x124] sm:$0xf]
      %v506 = vld [vmem:[%s3 + $0x128] sm:$0xf]
      %v507 = vld [vmem:[%s3 + $0x12c] sm:$0xf]
      %v508 = vld [vmem:[%s3 + $0x130] sm:$0xf]
      %v509 = vld [vmem:[%s3 + $0x134] sm:$0xf]
      %v510 = vld [vmem:[%s3 + $0x138] sm:$0xf]
      %v511 = vld [vmem:[%s3 + $0x13c] sm:$0xf]
      %v512 = vld [vmem:[%s3 + $0x140] sm:$0xf]
      %v513 = vld [vmem:[%s3 + $0x144] sm:$0xf]
      %v514 = vld [vmem:[%s3 + $0x148] sm:$0xf]
      %v515 = vld [vmem:[%s3 + $0x14c] sm:$0xf]
      %v516 = vld [vmem:[%s3 + $0x150] sm:$0xf]
      %v517 = vld [vmem:[%s3 + $0x154] sm:$0xf]
      %v518 = vld [vmem:[%s3 + $0x158] sm:$0xf]
      %v519 = vld [vmem:[%s3 + $0x15c] sm:$0xf]
      %v520 = vld [vmem:[%s3 + $0x160] sm:$0xf]
      %v521 = vld [vmem:[%s3 + $0x164] sm:$0xf]
      %v522 = vld [vmem:[%s3 + $0x168] sm:$0xf]
      %v523 = vld [vmem:[%s3 + $0x16c] sm:$0xf]
      %v524 = vld [vmem:[%s3 + $0x170] sm:$0xf]
      %v525 = vld [vmem:[%s3 + $0x174] sm:$0xf]
      %v526 = vld [vmem:[%s3 + $0x178] sm:$0xf]
      %v527 = vld [vmem:[%s3 + $0x17c] sm:$0xf]
      %v528 = vld [vmem:[%s3 + $0x180] sm:$0xf]
      %v529 = vld [vmem:[%s3 + $0x184] sm:$0xf]
      %v530 = vld [vmem:[%s3 + $0x188] sm:$0xf]
      %v531 = vld [vmem:[%s3 + $0x18c] sm:$0xf]
      %v532 = vld [vmem:[%s3 + $0x190] sm:$0xf]
      %v533 = vld [vmem:[%s3 + $0x194] sm:$0xf]
      %v534 = vld [vmem:[%s3 + $0x198] sm:$0xf]
      %v535 = vld [vmem:[%s3 + $0x19c] sm:$0xf]
      %v536 = vld [vmem:[%s3 + $0x1a0] sm:$0xf]
      %v537 = vld [vmem:[%s3 + $0x1a4] sm:$0xf]
      %v538 = vld [vmem:[%s3 + $0x1a8] sm:$0xf]
      %v539 = vld [vmem:[%s3 + $0x1ac] sm:$0xf]
      %v540 = vld [vmem:[%s3 + $0x1b0] sm:$0xf]
      %v541 = vld [vmem:[%s3 + $0x1b4] sm:$0xf]
      %v542 = vld [vmem:[%s3 + $0x1b8] sm:$0xf]
      %v543 = vld [vmem:[%s3 + $0x1bc] sm:$0xf]
      %v544 = vld [vmem:[%s3 + $0x1c0] sm:$0xf]
      %v545 = vld [vmem:[%s3 + $0x1c4] sm:$0xf]
      %v546 = vld [vmem:[%s3 + $0x1c8] sm:$0xf]
      %v547 = vld [vmem:[%s3 + $0x1cc] sm:$0xf]
      %v548 = vld [vmem:[%s3 + $0x1d0] sm:$0xf]
      %v549 = vld [vmem:[%s3 + $0x1d4] sm:$0xf]
      %v550 = vld [vmem:[%s3 + $0x1d8] sm:$0xf]
      %v551 = vld [vmem:[%s3 + $0x1dc] sm:$0xf]
      %v552 = vld [vmem:[%s3 + $0x1e0] sm:$0xf]
      %v553 = vld [vmem:[%s3 + $0x1e4] sm:$0xf]
      %v554 = vld [vmem:[%s3 + $0x1e8] sm:$0xf]
      %v555 = vld [vmem:[%s3 + $0x1ec] sm:$0xf]
      %v556 = vld [vmem:[%s3 + $0x1f0] sm:$0xf]
      %v557 = vld [vmem:[%s3 + $0x1f4] sm:$0xf]
      %v558 = vld [vmem:[%s3 + $0x1f8] sm:$0xf]
      %v559 = vld [vmem:[%s3 + $0x1fc] sm:$0xf]
      %v560 = vld [vmem:[%s3 + $0x200] sm:$0xf]
      %v561 = vld [vmem:[%s3 + $0x204] sm:$0xf]
      %v562 = vld [vmem:[%s3 + $0x208] sm:$0xf]
      %v563 = vld [vmem:[%s3 + $0x20c] sm:$0xf]
      %v564 = vld [vmem:[%s3 + $0x210] sm:$0xf]
      %v565 = vld [vmem:[%s3 + $0x214] sm:$0xf]
      %v566 = vld [vmem:[%s3 + $0x218] sm:$0xf]
      %v567 = vld [vmem:[%s3 + $0x21c] sm:$0xf]
      %v568 = vld [vmem:[%s3 + $0x220] sm:$0xf]
      %v569 = vld [vmem:[%s3 + $0x224] sm:$0xf]
      %v570 = vld [vmem:[%s3 + $0x228] sm:$0xf]
      %v571 = vld [vmem:[%s3 + $0x22c] sm:$0xf]
      %v572 = vld [vmem:[%s3 + $0x230] sm:$0xf]
      %v573 = vld [vmem:[%s3 + $0x234] sm:$0xf]
      %v574 = vld [vmem:[%s3 + $0x238] sm:$0xf]
      %v575 = vld [vmem:[%s3 + $0x23c] sm:$0xf]
      %v720 = vunpack.c.l.b16 %v432
      %v721 = vunpack.c.l.b16 %v433
      %v722 = vunpack.c.l.b16 %v434
      %v723 = vunpack.c.l.b16 %v435
      %v724 = vunpack.c.l.b16 %v436
      %v725 = vunpack.c.l.b16 %v437
      %v726 = vunpack.c.l.b16 %v438
      %v727 = vunpack.c.l.b16 %v439
      %v728 = vunpack.c.l.b16 %v440
      %v729 = vunpack.c.l.b16 %v441
      %v730 = vunpack.c.l.b16 %v442
      %v731 = vunpack.c.l.b16 %v443
      %v732 = vunpack.c.l.b16 %v444
      %v733 = vunpack.c.l.b16 %v445
      %v734 = vunpack.c.l.b16 %v446
      %v735 = vunpack.c.l.b16 %v447
      %v736 = vunpack.c.l.b16 %v448
      %v737 = vunpack.c.l.b16 %v449
      %v738 = vunpack.c.l.b16 %v450
      %v739 = vunpack.c.l.b16 %v451
      %v740 = vunpack.c.l.b16 %v452
      %v741 = vunpack.c.l.b16 %v453
      %v742 = vunpack.c.l.b16 %v454
      %v743 = vunpack.c.l.b16 %v455
      %v744 = vunpack.c.l.b16 %v456
      %v745 = vunpack.c.l.b16 %v457
      %v746 = vunpack.c.l.b16 %v458
      %v747 = vunpack.c.l.b16 %v459
      %v748 = vunpack.c.l.b16 %v460
      %v749 = vunpack.c.l.b16 %v461
      %v750 = vunpack.c.l.b16 %v462
      %v751 = vunpack.c.l.b16 %v463
      %v752 = vunpack.c.l.b16 %v464
      %v753 = vunpack.c.l.b16 %v465
      %v754 = vunpack.c.l.b16 %v466
      %v755 = vunpack.c.l.b16 %v467
      %v756 = vunpack.c.l.b16 %v468
      %v757 = vunpack.c.l.b16 %v469
      %v758 = vunpack.c.l.b16 %v470
      %v759 = vunpack.c.l.b16 %v471
      %v760 = vunpack.c.l.b16 %v472
      %v761 = vunpack.c.l.b16 %v473
      %v762 = vunpack.c.l.b16 %v474
      %v763 = vunpack.c.l.b16 %v475
      %v764 = vunpack.c.l.b16 %v476
      %v765 = vunpack.c.l.b16 %v477
      %v766 = vunpack.c.l.b16 %v478
      %v767 = vunpack.c.l.b16 %v479
      %v768 = vunpack.c.l.b16 %v480
      %v769 = vunpack.c.l.b16 %v481
      %v770 = vunpack.c.l.b16 %v482
      %v771 = vunpack.c.l.b16 %v483
      %v772 = vunpack.c.l.b16 %v484
      %v773 = vunpack.c.l.b16 %v485
      %v774 = vunpack.c.l.b16 %v486
      %v775 = vunpack.c.l.b16 %v487
      %v776 = vunpack.c.l.b16 %v488
      %v777 = vunpack.c.l.b16 %v489
      %v778 = vunpack.c.l.b16 %v490
      %v779 = vunpack.c.l.b16 %v491
      %v780 = vunpack.c.l.b16 %v492
      %v781 = vunpack.c.l.b16 %v493
      %v782 = vunpack.c.l.b16 %v494
      %v783 = vunpack.c.l.b16 %v495
      %v784 = vunpack.c.l.b16 %v496
      %v785 = vunpack.c.l.b16 %v497
      %v786 = vunpack.c.l.b16 %v498
      %v787 = vunpack.c.l.b16 %v499
      %v788 = vunpack.c.l.b16 %v500
      %v789 = vunpack.c.l.b16 %v501
      %v790 = vunpack.c.l.b16 %v502
      %v791 = vunpack.c.l.b16 %v503
      %v792 = vunpack.c.l.b16 %v504
      %v793 = vunpack.c.l.b16 %v505
      %v794 = vunpack.c.l.b16 %v506
      %v795 = vunpack.c.l.b16 %v507
      %v796 = vunpack.c.l.b16 %v508
      %v797 = vunpack.c.l.b16 %v509
      %v798 = vunpack.c.l.b16 %v510
      %v799 = vunpack.c.l.b16 %v511
      %v800 = vunpack.c.l.b16 %v512
      %v801 = vunpack.c.l.b16 %v513
      %v802 = vunpack.c.l.b16 %v514
      %v803 = vunpack.c.l.b16 %v515
      %v804 = vunpack.c.l.b16 %v516
      %v805 = vunpack.c.l.b16 %v517
      %v806 = vunpack.c.l.b16 %v518
      %v807 = vunpack.c.l.b16 %v519
      %v808 = vunpack.c.l.b16 %v520
      %v809 = vunpack.c.l.b16 %v521
      %v810 = vunpack.c.l.b16 %v522
      %v811 = vunpack.c.l.b16 %v523
      %v812 = vunpack.c.l.b16 %v524
      %v813 = vunpack.c.l.b16 %v525
      %v814 = vunpack.c.l.b16 %v526
      %v815 = vunpack.c.l.b16 %v527
      %v816 = vunpack.c.l.b16 %v528
      %v817 = vunpack.c.l.b16 %v529
      %v818 = vunpack.c.l.b16 %v530
      %v819 = vunpack.c.l.b16 %v531
      %v820 = vunpack.c.l.b16 %v532
      %v821 = vunpack.c.l.b16 %v533
      %v822 = vunpack.c.l.b16 %v534
      %v823 = vunpack.c.l.b16 %v535
      %v824 = vunpack.c.l.b16 %v536
      %v825 = vunpack.c.l.b16 %v537
      %v826 = vunpack.c.l.b16 %v538
      %v827 = vunpack.c.l.b16 %v539
      %v828 = vunpack.c.l.b16 %v540
      %v829 = vunpack.c.l.b16 %v541
      %v830 = vunpack.c.l.b16 %v542
      %v831 = vunpack.c.l.b16 %v543
      %v832 = vunpack.c.l.b16 %v544
      %v833 = vunpack.c.l.b16 %v545
      %v834 = vunpack.c.l.b16 %v546
      %v835 = vunpack.c.l.b16 %v547
      %v836 = vunpack.c.l.b16 %v548
      %v837 = vunpack.c.l.b16 %v549
      %v838 = vunpack.c.l.b16 %v550
      %v839 = vunpack.c.l.b16 %v551
      %v840 = vunpack.c.l.b16 %v552
      %v841 = vunpack.c.l.b16 %v553
      %v842 = vunpack.c.l.b16 %v554
      %v843 = vunpack.c.l.b16 %v555
      %v844 = vunpack.c.l.b16 %v556
      %v845 = vunpack.c.l.b16 %v557
      %v846 = vunpack.c.l.b16 %v558
      %v847 = vunpack.c.l.b16 %v559
      %v848 = vunpack.c.l.b16 %v560
      %v849 = vunpack.c.l.b16 %v561
      %v850 = vunpack.c.l.b16 %v562
      %v851 = vunpack.c.l.b16 %v563
      %v852 = vunpack.c.l.b16 %v564
      %v853 = vunpack.c.l.b16 %v565
      %v854 = vunpack.c.l.b16 %v566
      %v855 = vunpack.c.l.b16 %v567
      %v856 = vunpack.c.l.b16 %v568
      %v857 = vunpack.c.l.b16 %v569
      %v858 = vunpack.c.l.b16 %v570
      %v859 = vunpack.c.l.b16 %v571
      %v860 = vunpack.c.l.b16 %v572
      %v861 = vunpack.c.l.b16 %v573
      %v862 = vunpack.c.l.b16 %v574
      %v863 = vunpack.c.l.b16 %v575
      %v864 = vpack.c.b16 %v721, %v720
      %v865 = vpack.c.b16 %v723, %v722
      %v866 = vpack.c.b16 %v725, %v724
      %v867 = vpack.c.b16 %v727, %v726
      %v868 = vpack.c.b16 %v729, %v728
      %v869 = vpack.c.b16 %v731, %v730
      %v870 = vpack.c.b16 %v733, %v732
      %v871 = vpack.c.b16 %v735, %v734
      %v872 = vpack.c.b16 %v737, %v736
      %v873 = vpack.c.b16 %v739, %v738
      %v874 = vpack.c.b16 %v741, %v740
      %v875 = vpack.c.b16 %v743, %v742
      %v876 = vpack.c.b16 %v745, %v744
      %v877 = vpack.c.b16 %v747, %v746
      %v878 = vpack.c.b16 %v749, %v748
      %v879 = vpack.c.b16 %v751, %v750
      %v880 = vpack.c.b16 %v753, %v752
      %v881 = vpack.c.b16 %v755, %v754
      %v882 = vpack.c.b16 %v757, %v756
      %v883 = vpack.c.b16 %v759, %v758
      %v884 = vpack.c.b16 %v761, %v760
      %v885 = vpack.c.b16 %v763, %v762
      %v886 = vpack.c.b16 %v765, %v764
      %v887 = vpack.c.b16 %v767, %v766
      %v888 = vpack.c.b16 %v769, %v768
      %v889 = vpack.c.b16 %v771, %v770
      %v890 = vpack.c.b16 %v773, %v772
      %v891 = vpack.c.b16 %v775, %v774
      %v892 = vpack.c.b16 %v777, %v776
      %v893 = vpack.c.b16 %v779, %v778
      %v894 = vpack.c.b16 %v781, %v780
      %v895 = vpack.c.b16 %v783, %v782
      %v896 = vpack.c.b16 %v785, %v784
      %v897 = vpack.c.b16 %v787, %v786
      %v898 = vpack.c.b16 %v789, %v788
      %v899 = vpack.c.b16 %v791, %v790
      %v900 = vpack.c.b16 %v793, %v792
      %v901 = vpack.c.b16 %v795, %v794
      %v902 = vpack.c.b16 %v797, %v796
      %v903 = vpack.c.b16 %v799, %v798
      %v904 = vpack.c.b16 %v801, %v800
      %v905 = vpack.c.b16 %v803, %v802
      %v906 = vpack.c.b16 %v805, %v804
      %v907 = vpack.c.b16 %v807, %v806
      %v908 = vpack.c.b16 %v809, %v808
      %v909 = vpack.c.b16 %v811, %v810
      %v910 = vpack.c.b16 %v813, %v812
      %v911 = vpack.c.b16 %v815, %v814
      %v912 = vpack.c.b16 %v817, %v816
      %v913 = vpack.c.b16 %v819, %v818
      %v914 = vpack.c.b16 %v821, %v820
      %v915 = vpack.c.b16 %v823, %v822
      %v916 = vpack.c.b16 %v825, %v824
      %v917 = vpack.c.b16 %v827, %v826
      %v918 = vpack.c.b16 %v829, %v828
      %v919 = vpack.c.b16 %v831, %v830
      %v920 = vpack.c.b16 %v833, %v832
      %v921 = vpack.c.b16 %v835, %v834
      %v922 = vpack.c.b16 %v837, %v836
      %v923 = vpack.c.b16 %v839, %v838
      %v924 = vpack.c.b16 %v841, %v840
      %v925 = vpack.c.b16 %v843, %v842
      %v926 = vpack.c.b16 %v845, %v844
      %v927 = vpack.c.b16 %v847, %v846
      %v928 = vpack.c.b16 %v849, %v848
      %v929 = vpack.c.b16 %v851, %v850
      %v930 = vpack.c.b16 %v853, %v852
      %v931 = vpack.c.b16 %v855, %v854
      %v932 = vpack.c.b16 %v857, %v856
      %v933 = vpack.c.b16 %v859, %v858
      %v934 = vpack.c.b16 %v861, %v860
      %v935 = vpack.c.b16 %v863, %v862
      %1008 = vmatprep.subr.bf16.mxu0 0
      %1009 = vmatpush1.bf16.msra.mxu0 %v864
      %1010 = vmatprep.subr.bf16.mxu0 0
      %1011 = vmatpush1.bf16.msra.mxu0 %v865
      %1012 = vmatprep.subr.bf16.mxu0 0
      %1013 = vmatpush1.bf16.msra.mxu0 %v866
      %1014 = vmatprep.subr.bf16.mxu0 0
      %1015 = vmatpush1.bf16.msra.mxu0 %v867
      %1016 = vmatprep.subr.bf16.mxu0 0
      %1017 = vmatpush1.bf16.msra.mxu0 %v868
      %1018 = vmatprep.subr.bf16.mxu0 0
      %1019 = vmatpush1.bf16.msra.mxu0 %v869
      %1020 = vmatprep.subr.bf16.mxu0 0
      %1021 = vmatpush1.bf16.msra.mxu0 %v870
      %1022 = vmatprep.subr.bf16.mxu0 0
      %1023 = vmatpush1.bf16.msra.mxu0 %v871
      %1024 = vmatprep.subr.bf16.mxu0 0
      %1025 = vmatpush1.bf16.msra.mxu0 %v872
      %1026 = vmatprep.subr.bf16.mxu0 0
      %1027 = vmatpush1.bf16.msra.mxu0 %v873
      %1028 = vmatprep.subr.bf16.mxu0 0
      %1029 = vmatpush1.bf16.msra.mxu0 %v874
      %1030 = vmatprep.subr.bf16.mxu0 0
      %1031 = vmatpush1.bf16.msra.mxu0 %v875
      %1032 = vmatprep.subr.bf16.mxu0 0
      %1033 = vmatpush1.bf16.msra.mxu0 %v876
      %1034 = vmatprep.subr.bf16.mxu0 0
      %1035 = vmatpush1.bf16.msra.mxu0 %v877
      %1036 = vmatprep.subr.bf16.mxu0 0
      %1037 = vmatpush1.bf16.msra.mxu0 %v878
      %1038 = vmatprep.subr.bf16.mxu0 0
      %1039 = vmatpush1.bf16.msra.mxu0 %v879
      %1040 = vmatprep.mubr.bf16.mxu0 %v424
      %1041 = vmatmul.mubr.bf16.gmra.mrb[0].mxu0 %v423
      %v1042 = vpop.f32.mrb[0].mxu0
      %v1043 = vadd.f32 0.0, %v1042
      %v1044 = vpop.f32.mrb[0].mxu0
      %v1045 = vpop.f32.mrb[0].mxu0
      %v1046 = vadd.f32 0.0, %v1045
      %v1047 = vpop.f32.mrb[0].mxu0
      %1048 = vdwg.mxu0
      %1049 = vmatprep.subr.bf16.mxu0 0
      %1050 = vmatpush1.bf16.msra.mxu0 %v880
      %1051 = vmatprep.subr.bf16.mxu0 0
      %1052 = vmatpush1.bf16.msra.mxu0 %v881
      %1053 = vmatprep.subr.bf16.mxu0 0
      %1054 = vmatpush1.bf16.msra.mxu0 %v882
      %1055 = vmatprep.subr.bf16.mxu0 0
      %1056 = vmatpush1.bf16.msra.mxu0 %v883
      %1057 = vmatprep.subr.bf16.mxu0 0
      %1058 = vmatpush1.bf16.msra.mxu0 %v884
      %1059 = vmatprep.subr.bf16.mxu0 0
      %1060 = vmatpush1.bf16.msra.mxu0 %v885
      %1061 = vmatprep.subr.bf16.mxu0 0
      %1062 = vmatpush1.bf16.msra.mxu0 %v886
      %1063 = vmatprep.subr.bf16.mxu0 0
      %1064 = vmatpush1.bf16.msra.mxu0 %v887
      %1065 = vmatprep.subr.bf16.mxu0 0
      %1066 = vmatpush1.bf16.msra.mxu0 %v888
      %1067 = vmatprep.subr.bf16.mxu0 0
      %1068 = vmatpush1.bf16.msra.mxu0 %v889
      %1069 = vmatprep.subr.bf16.mxu0 0
      %1070 = vmatpush1.bf16.msra.mxu0 %v890
      %1071 = vmatprep.subr.bf16.mxu0 0
      %1072 = vmatpush1.bf16.msra.mxu0 %v891
      %1073 = vmatprep.subr.bf16.mxu0 0
      %1074 = vmatpush1.bf16.msra.mxu0 %v892
      %1075 = vmatprep.subr.bf16.mxu0 0
      %1076 = vmatpush1.bf16.msra.mxu0 %v893
      %1077 = vmatprep.subr.bf16.mxu0 0
      %1078 = vmatpush1.bf16.msra.mxu0 %v894
      %1079 = vmatprep.subr.bf16.mxu0 0
      %1080 = vmatpush1.bf16.msra.mxu0 %v895
      %1081 = vmatprep.mubr.bf16.mxu0 %v426
      %1082 = vmatmul.mubr.bf16.gmra.mrb[0].mxu0 %v425
      %v1083 = vpop.f32.mrb[0].mxu0
      %v1084 = vadd.f32 %v1043, %v1083
      %v1085 = vpop.f32.mrb[0].mxu0
      %v1086 = vpop.f32.mrb[0].mxu0
      %v1087 = vadd.f32 %v1046, %v1086
      %v1088 = vpop.f32.mrb[0].mxu0
      %1089 = vdwg.mxu0
      %1090 = vmatprep.subr.bf16.mxu0 0
      %1091 = vmatpush1.bf16.msra.mxu0 %v896
      %1092 = vmatprep.subr.bf16.mxu0 0
      %1093 = vmatpush1.bf16.msra.mxu0 %v897
      %1094 = vmatprep.subr.bf16.mxu0 0
      %1095 = vmatpush1.bf16.msra.mxu0 %v898
      %1096 = vmatprep.subr.bf16.mxu0 0
      %1097 = vmatpush1.bf16.msra.mxu0 %v899
      %1098 = vmatprep.subr.bf16.mxu0 0
      %1099 = vmatpush1.bf16.msra.mxu0 %v900
      %1100 = vmatprep.subr.bf16.mxu0 0
      %1101 = vmatpush1.bf16.msra.mxu0 %v901
      %1102 = vmatprep.subr.bf16.mxu0 0
      %1103 = vmatpush1.bf16.msra.mxu0 %v902
      %1104 = vmatprep.subr.bf16.mxu0 0
      %1105 = vmatpush1.bf16.msra.mxu0 %v903
      %1106 = vmatprep.subr.bf16.mxu0 0
      %1107 = vmatpush1.bf16.msra.mxu0 %v904
      %1108 = vmatprep.subr.bf16.mxu0 0
      %1109 = vmatpush1.bf16.msra.mxu0 %v905
      %1110 = vmatprep.subr.bf16.mxu0 0
      %1111 = vmatpush1.bf16.msra.mxu0 %v906
      %1112 = vmatprep.subr.bf16.mxu0 0
      %1113 = vmatpush1.bf16.msra.mxu0 %v907
      %1114 = vmatprep.subr.bf16.mxu0 0
      %1115 = vmatpush1.bf16.msra.mxu0 %v908
      %1116 = vmatprep.subr.bf16.mxu0 0
      %1117 = vmatpush1.bf16.msra.mxu0 %v909
      %1118 = vmatprep.subr.bf16.mxu0 0
      %1119 = vmatpush1.bf16.msra.mxu0 %v910
      %1120 = vmatprep.subr.bf16.mxu0 0
      %1121 = vmatpush1.bf16.msra.mxu0 %v911
      %1122 = vmatprep.mubr.bf16.mxu0 %v428
      %1123 = vmatmul.mubr.bf16.gmra.mrb[0].mxu0 %v427
      %v1124 = vpop.f32.mrb[0].mxu0
      %v1125 = vadd.f32 %v1084, %v1124
      %v1126 = vpop.f32.mrb[0].mxu0
      %v1127 = vpop.f32.mrb[0].mxu0
      %v1128 = vadd.f32 %v1087, %v1127
      %v1129 = vpop.f32.mrb[0].mxu0
      %1130 = vdwg.mxu0
      %1131 = vmatprep.subr.bf16.mxu0 0
      %1132 = vmatpush1.bf16.msra.mxu0 %v912
      %1133 = vmatprep.subr.bf16.mxu0 0
      %1134 = vmatpush1.bf16.msra.mxu0 %v913
      %1135 = vmatprep.subr.bf16.mxu0 0
      %1136 = vmatpush1.bf16.msra.mxu0 %v914
      %1137 = vmatprep.subr.bf16.mxu0 0
      %1138 = vmatpush1.bf16.msra.mxu0 %v915
      %1139 = vmatprep.subr.bf16.mxu0 0
      %1140 = vmatpush1.bf16.msra.mxu0 %v916
      %1141 = vmatprep.subr.bf16.mxu0 0
      %1142 = vmatpush1.bf16.msra.mxu0 %v917
      %1143 = vmatprep.subr.bf16.mxu0 0
      %1144 = vmatpush1.bf16.msra.mxu0 %v918
      %1145 = vmatprep.subr.bf16.mxu0 0
      %1146 = vmatpush1.bf16.msra.mxu0 %v919
      %1147 = vmatprep.subr.bf16.mxu0 0
      %1148 = vmatpush1.bf16.msra.mxu0 %v920
      %1149 = vmatprep.subr.bf16.mxu0 0
      %1150 = vmatpush1.bf16.msra.mxu0 %v921
      %1151 = vmatprep.subr.bf16.mxu0 0
      %1152 = vmatpush1.bf16.msra.mxu0 %v922
      %1153 = vmatprep.subr.bf16.mxu0 0
      %1154 = vmatpush1.bf16.msra.mxu0 %v923
      %1155 = vmatprep.subr.bf16.mxu0 0
      %1156 = vmatpush1.bf16.msra.mxu0 %v924
      %1157 = vmatprep.subr.bf16.mxu0 0
      %1158 = vmatpush1.bf16.msra.mxu0 %v925
      %1159 = vmatprep.subr.bf16.mxu0 0
      %1160 = vmatpush1.bf16.msra.mxu0 %v926
      %1161 = vmatprep.subr.bf16.mxu0 0
      %1162 = vmatpush1.bf16.msra.mxu0 %v927
      %1163 = vmatprep.mubr.bf16.mxu0 %v430
      %1164 = vmatmul.mubr.bf16.gmra.mrb[0].mxu0 %v429
      %v1165 = vpop.f32.mrb[0].mxu0
      %v1166 = vadd.f32 %v1125, %v1165
      %v1167 = vpop.f32.mrb[0].mxu0
      %v1168 = vpop.f32.mrb[0].mxu0
      %v1169 = vadd.f32 %v1128, %v1168
      %v1170 = vpop.f32.mrb[0].mxu0
      %1171 = vdwg.mxu0
      %1172 = vmatprep.subr.bf16.mxu0 0
      %1173 = vmatpush1.bf16.msra.mxu0 %v928
      %1174 = vmatprep.subr.bf16.mxu0 0
      %1175 = vmatpush1.bf16.msra.mxu0 %v929
      %1176 = vmatprep.subr.bf16.mxu0 0
      %1177 = vmatpush1.bf16.msra.mxu0 %v930
      %1178 = vmatprep.subr.bf16.mxu0 0
      %1179 = vmatpush1.bf16.msra.mxu0 %v931
      %1180 = vmatprep.subr.bf16.mxu0 0
      %1181 = vmatpush1.bf16.msra.mxu0 %v932
      %1182 = vmatprep.subr.bf16.mxu0 0
      %1183 = vmatpush1.bf16.msra.mxu0 %v933
      %1184 = vmatprep.subr.bf16.mxu0 0
      %1185 = vmatpush1.bf16.msra.mxu0 %v934
      %1186 = vmatprep.subr.bf16.mxu0 0
      %1187 = vmatpush1.bf16.msra.mxu0 %v935
      %1188 = vmatprep.subr.bf16.mxu0 0
      %1189 = vmatpush1.bf16.msra.mxu0 0
      %1190 = vmatprep.subr.bf16.mxu0 0
      %1191 = vmatpush1.bf16.msra.mxu0 0
      %1192 = vmatprep.subr.bf16.mxu0 0
      %1193 = vmatpush1.bf16.msra.mxu0 0
      %1194 = vmatprep.subr.bf16.mxu0 0
      %1195 = vmatpush1.bf16.msra.mxu0 0
      %1196 = vmatprep.subr.bf16.mxu0 0
      %1197 = vmatpush1.bf16.msra.mxu0 0
      %1198 = vmatprep.subr.bf16.mxu0 0
      %1199 = vmatpush1.bf16.msra.mxu0 0
      %1200 = vmatprep.subr.bf16.mxu0 0
      %1201 = vmatpush1.bf16.msra.mxu0 0
      %1202 = vmatprep.subr.bf16.mxu0 0
      %1203 = vmatpush1.bf16.msra.mxu0 0
      %1204 = vmatprep.mubr.bf16.mxu0 0
      %1205 = vmatmul.mubr.bf16.gmra.mrb[0].mxu0 %v431
      %v1206 = vpop.f32.mrb[0].mxu0
      %v1207 = vadd.f32 %v1166, %v1206
      %v1208 = vpop.f32.mrb[0].mxu0
      %v1209 = vpop.f32.mrb[0].mxu0
      %v1210 = vadd.f32 %v1169, %v1209
      %v1211 = vpop.f32.mrb[0].mxu0
      %1212 = vdwg.mxu0
      %v1213 = vpack.c.bf16 %v1210, %v1207
      %v1215 = vunpack.c.l.b16 %v1213
      %v1216 = vunpack.c.h.b16 %v1213
      %v1217 = vpack.c.b16 %v1215, %v1215
      %v1218 = vpack.c.b16 %v1216, %v1216
      %1221 = vst [vmem:[%s236] sm:$0xf] %v1217
      %1222 = vst [vmem:[%s236 + $0x4] sm:$0xf] %v1218
      %v1223 = vlaneseq
      %v1224 = vshrl.u32 %v1223, 7
      %v1225 = vadd.s32 %v1224, 8
      %s1226 = smul.u32 %s17, 16
      %v1227 = vstv %s1226
      %v1228 = vadd.s32 %v1224, %v1227
      %v1229 = vadd.s32 %v1225, %v1227
      %vm1230 = vcmp.lt.s32.totalorder %v1228, 18
      %vm1231 = vcmp.lt.s32.totalorder %v1229, 18
      %v1232 = vsel %vm1230, 1, 0
      %v1233 = vsel %vm1231, 1, 0
      %vm1234 = vcmp.eq.s32.totalorder %v1232, 1
      %vm1235 = vcmp.eq.s32.totalorder %v1233, 1
      %v1236 = vsel %vm1234, %v1207, 0.0
      %v1237 = vsel %vm1235, %v1210, 0.0
      %v1238 = vadd.f32 %v1236, %v1237
      %v1239 = vrot.slane %v1238, 4
      %v1240 = vadd.f32 %v1238, %v1239
      %v1241 = vrot.slane %v1240, 2
      %v1242 = vadd.f32 %v1240, %v1241
      %v1243 = vrot.slane %v1242, 1
      %v1244 = vadd.f32 %v1242, %v1243
      %v1245 = vmul.f32 %v1236, %v1236
      %v1246 = vmul.f32 %v1237, %v1237
      %v1247 = vadd.f32 %v1245, %v1246
      %v1248 = vrot.slane %v1247, 4
      %v1249 = vadd.f32 %v1247, %v1248
      %v1250 = vrot.slane %v1249, 2
      %v1251 = vadd.f32 %v1249, %v1250
      %v1252 = vrot.slane %v1251, 1
      %v1253 = vadd.f32 %v1251, %v1252
      %vm1254 = vcmp.eq.s32.totalorder %v1224, 0
      %v1255 = vsel %vm1254, 1, 0
      %vm1256 = vcmp.eq.s32.totalorder %v1255, 1
      %v1257 = vsel %vm1256, %v1244, %v1253
      %1258 = vst [vmem:[%s241] sm:$0x3] %v1257
      %s1259 = smul.u32 2, %s17
      %p1260 = scmp.lt.s32.totalorder %s1259, 3
      %s1261 = scalar_select %p1260, %s1259, 3
      %s1262 = smul.addr %s1261, 4
      %s1263 = scalar_lea.vmem %s4, %s1262
      %p1264 = scmp.lt.s32.totalorder %s17, 1
      %s1265 = scalar_select %p1264, %s17, 1
      %s1266 = smul.addr %s1265, 2
      %s1267 = scalar_lea.vmem %s5, %s1266
      // Predicated region
      $region37: #{conv_network_forward.4} parent=35 // pred_check
        %p1268 = pneg %p124
      $region38: #{conv_network_forward.4} parent=35 // pred_check_branch
        %1270 = sbr.rel (%p1268) target = $region40
      $region39: #{conv_network_forward.4} parent=35 // pred_region
        %s1271 = smul.u32 2, %s17
      $region40: #{conv_network_forward.4} parent=35 // pred_fallthru
        _
      // Predicated region
      $region41: #{conv_network_forward.4} parent=35 // pred_check
        %p1272 = pneg %p150
      $region42: #{conv_network_forward.4} parent=35 // pred_check_branch
        %1274 = sbr.rel (%p1272) target = $region44
      $region43: #{conv_network_forward.4} parent=35 // pred_region
        _
      $region44: #{conv_network_forward.4} parent=35 // pred_fallthru
        _
    $region36: #{conv_network_forward.4} parent=5 // pred_fallthru
      _
    %p1275 = scmp.le.s32.totalorder 2, %s12
    // Predicated region
    $region45: #{conv_network_forward.4} parent=5 // pred_check
      %p1276 = pneg %p1275
    $region46: #{conv_network_forward.4} parent=5 // pred_check_branch
      %1278 = sbr.rel (%p1276) target = $region48
    $region47: #{conv_network_forward.4} parent=5 // pred_region
      %s1279 = ssub.s32 %s12, 2
      // Predicated region
      $region49: #{conv_network_forward.4} parent=47 // pred_check
        %p1280 = pneg %p130
      $region50: #{conv_network_forward.4} parent=47 // pred_check_branch
        %1282 = sbr.rel (%p1280) target = $region52
      $region51: #{conv_network_forward.4} parent=47 // pred_region
        %s1283 = smul.u32 2, %s18
        %p1284 = scmp.lt.s32.totalorder %s1283, 3
        %s1285 = scalar_select %p1284, %s1283, 3
        %s1286 = smul.addr %s1285, 4
        %s1287 = scalar_lea.vmem %s4, %s1286
      $region52: #{conv_network_forward.4} parent=47 // pred_fallthru
        _
      // Predicated region
      $region53: #{conv_network_forward.4} parent=47 // pred_check
        %p1288 = pneg %p156
      $region54: #{conv_network_forward.4} parent=47 // pred_check_branch
        %1290 = sbr.rel (%p1288) target = $region56
      $region55: #{conv_network_forward.4} parent=47 // pred_region
        %p1291 = scmp.lt.s32.totalorder %s18, 1
        %s1292 = scalar_select %p1291, %s18, 1
        %s1293 = smul.addr %s1292, 2
        %s1294 = scalar_lea.vmem %s5, %s1293
      $region56: #{conv_network_forward.4} parent=47 // pred_fallthru
        _
    $region48: #{conv_network_forward.4} parent=5 // pred_fallthru
      _
  $region6: #{conv_network_forward.4} parent=0 // loop_footer
    %s16 = sadd.s32 1, %s12
  $region7: #{conv_network_forward.4} parent=0 // loop_footer_branch
    %11 = sbr.rel target = $region3
  $region8: #{conv_network_forward.4} parent=0 // loop_exit
    _

// kernel: conv_network_forward.5
$region0: #{conv_network_forward.5}
  #allocation0 [shape = 'u32[]', space=smem, size = 0x4, offset = 0x4, fixed_abs, tag = 'smem constant byte address 0x4 - core index']
  #allocation1 [shape = 'u32[144,128]{1,0:T(1,128)}', space=vmem, size = 0x12000, scoped, tag = 'internal scratch']
  #allocation2 [shape = 'f32[1,128]{1,0:T(1,128)}', space=vmem, size = 0x200, scoped, tag = 'scratch operand']
  %s0 = inlined_call_operand.vmem [shape: bf16[2,16,128], index: 0, kind: input, shape index: {}]
  %s1 = inlined_call_operand.vmem [shape: f32[1,128], index: 1, kind: input, shape index: {}]
  %s2 = inlined_call_operand.vmem [shape: f32[1,128], index: 2, kind: input, shape index: {}]
  %s3 = inlined_call_operand.vmem [shape: bf16[128,128], index: 3, kind: input, shape index: {}]
  %s4 = inlined_call_operand.vmem [shape: f32[1,128], index: 4, kind: input, shape index: {}]
  %s5 = inlined_call_operand.hbm [shape: f32[2,1,128], index: 5, kind: output, shape index: {}]
  %s6 = sld [smem:[#allocation0]]
  $region61: #{conv_network_forward.5} parent=0
    _
  %s8 = ssub.s32 1, %s6
  %s9 = scalar_select 0, %s8, %s6
  $region1: #{conv_network_forward.5} parent=0
    #allocation3 [shape = 'u8[1024]{0}', space=vmem, size = 0x400, scoped, tag = 'output window, operand 0']
    #allocation4 [shape = 's32[2]{0}', space=sflag, size = 0x8, scoped, tag = 'scoped memory for conv_network_forward.5']
    %10 = vsyncpa [#allocation4], 0
    %s11 = scalar_lea.sflag [#allocation4], 1
    %12 = vsyncpa %s11, 0
    loop: start=0, step=1, limit=4
    $region2: #{conv_network_forward.5} parent=1 // loop_pre_header
      _
    $region3: #{conv_network_forward.5} parent=1 // loop_header
      %s14 = sphi 0, %s18
      %p15 = scmp.ge.s32.totalorder %s14, 4
      %s21 = sphi 0, %s33
      %s22 = sphi 0, %s29
      %s23 = sphi 0, %s21
      %s24 = sphi 0, %s22
      %s25 = sphi 0, %s23
      %s26 = sphi 0, %s24
      %s38 = sphi 0, %s40
      %s41 = sphi 0, %s38
      %s42 = sphi 0, %s41
      %s58 = sphi 0, %s42
      %s62 = sphi 0, %s62
      %s64 = sphi 0, %s62
      %s65 = sphi 0, %s64
      %s79 = sphi 0, %s65
      %s83 = sphi 0, %s83
      %s85 = sphi 0, %s83
      %s86 = sphi 0, %s85
      %s100 = sphi 0, %s86
      %s104 = sphi 0, %s104
      %s106 = sphi 0, %s104
      %s107 = sphi 0, %s106
      %s121 = sphi 0, %s107
      %s125 = sphi 0, %s125
      %s127 = sphi 0, %s125
      %s128 = sphi 0, %s127
      %s142 = sphi 0, %s128
      %s148 = sphi 0, %s150
      %s151 = sphi 0, %s148
      %s152 = sphi 0, %s151
      %s168 = sphi 0, %s152
    $region4: #{conv_network_forward.5} parent=1 // loop_header_branch
      %17 = sbr.rel (%p15) target = $region8
    $region5: #{conv_network_forward.5} parent=1 // loop_body
      %s19 = ssub.s32 %s14, 1
      %s20 = ssub.s32 %s14, 2
      %s27 = sadd.s32 1, %s22
      %p28 = scmp.ge.s32.totalorder %s27, 1
      %s29 = scalar_select %p28, 0, %s27
      %s30 = sadd.s32 1, %s21
      %s31 = scalar_select %p28, %s30, %s21
      %p32 = scmp.ge.s32.totalorder %s31, 2
      %s33 = scalar_select %p32, 0, %s31
      %s34 = ssub.s32 %s21, %s33
      %s35 = ssub.s32 %s22, %s29
      %s36 = sor.u32 %s34, %s35
      %p37 = scmp.eq.s32.totalorder %s36, 0
      %s39 = sadd.s32 %s38, 1
      %s40 = scalar_select %p37, %s38, %s39
      %p43 = pneg %p37
      %p44 = scmp.eq.s32.totalorder %s14, 1
      %p45 = por %p43, %p44
      %p46 = scmp.ne.s32.totalorder %s38, %s41
      %p47 = scmp.eq.s32.totalorder %s14, 0
      %p48 = por %p46, %p47
      %p49 = scmp.ne.s32.totalorder %s38, %s41
      %p50 = scmp.eq.s32.totalorder %s19, 1
      %p51 = por %p49, %p50
      %p52 = scmp.ne.s32.totalorder %s41, %s42
      %p53 = scmp.eq.s32.totalorder %s19, 0
      %p54 = por %p52, %p53
      %p55 = scmp.ne.s32.totalorder %s41, %s42
      %p56 = scmp.eq.s32.totalorder %s20, 1
      %p57 = por %p55, %p56
      %p59 = scmp.ne.s32.totalorder %s42, %s58
      %p60 = scmp.eq.s32.totalorder %s20, 0
      %p61 = por %p59, %p60
      %s63 = sadd.s32 %s62, 1
      %p66 = scmp.eq.s32.totalorder %s14, 1
      %p67 = scmp.ne.s32.totalorder %s62, %s64
      %p68 = scmp.eq.s32.totalorder %s14, 0
      %p69 = por %p67, %p68
      %p70 = scmp.ne.s32.totalorder %s62, %s64
      %p71 = scmp.eq.s32.totalorder %s19, 1
      %p72 = por %p70, %p71
      %p73 = scmp.ne.s32.totalorder %s64, %s65
      %p74 = scmp.eq.s32.totalorder %s19, 0
      %p75 = por %p73, %p74
      %p76 = scmp.ne.s32.totalorder %s64, %s65
      %p77 = scmp.eq.s32.totalorder %s20, 1
      %p78 = por %p76, %p77
      %p80 = scmp.ne.s32.totalorder %s65, %s79
      %p81 = scmp.eq.s32.totalorder %s20, 0
      %p82 = por %p80, %p81
      %s84 = sadd.s32 %s83, 1
      %p87 = scmp.eq.s32.totalorder %s14, 1
      %p88 = scmp.ne.s32.totalorder %s83, %s85
      %p89 = scmp.eq.s32.totalorder %s14, 0
      %p90 = por %p88, %p89
      %p91 = scmp.ne.s32.totalorder %s83, %s85
      %p92 = scmp.eq.s32.totalorder %s19, 1
      %p93 = por %p91, %p92
      %p94 = scmp.ne.s32.totalorder %s85, %s86
      %p95 = scmp.eq.s32.totalorder %s19, 0
      %p96 = por %p94, %p95
      %p97 = scmp.ne.s32.totalorder %s85, %s86
      %p98 = scmp.eq.s32.totalorder %s20, 1
      %p99 = por %p97, %p98
      %p101 = scmp.ne.s32.totalorder %s86, %s100
      %p102 = scmp.eq.s32.totalorder %s20, 0
      %p103 = por %p101, %p102
      %s105 = sadd.s32 %s104, 1
      %p108 = scmp.eq.s32.totalorder %s14, 1
      %p109 = scmp.ne.s32.totalorder %s104, %s106
      %p110 = scmp.eq.s32.totalorder %s14, 0
      %p111 = por %p109, %p110
      %p112 = scmp.ne.s32.totalorder %s104, %s106
      %p113 = scmp.eq.s32.totalorder %s19, 1
      %p114 = por %p112, %p113
      %p115 = scmp.ne.s32.totalorder %s106, %s107
      %p116 = scmp.eq.s32.totalorder %s19, 0
      %p117 = por %p115, %p116
      %p118 = scmp.ne.s32.totalorder %s106, %s107
      %p119 = scmp.eq.s32.totalorder %s20, 1
      %p120 = por %p118, %p119
      %p122 = scmp.ne.s32.totalorder %s107, %s121
      %p123 = scmp.eq.s32.totalorder %s20, 0
      %p124 = por %p122, %p123
      %s126 = sadd.s32 %s125, 1
      %p129 = scmp.eq.s32.totalorder %s14, 1
      %p130 = scmp.ne.s32.totalorder %s125, %s127
      %p131 = scmp.eq.s32.totalorder %s14, 0
      %p132 = por %p130, %p131
      %p133 = scmp.ne.s32.totalorder %s125, %s127
      %p134 = scmp.eq.s32.totalorder %s19, 1
      %p135 = por %p133, %p134
      %p136 = scmp.ne.s32.totalorder %s127, %s128
      %p137 = scmp.eq.s32.totalorder %s19, 0
      %p138 = por %p136, %p137
      %p139 = scmp.ne.s32.totalorder %s127, %s128
      %p140 = scmp.eq.s32.totalorder %s20, 1
      %p141 = por %p139, %p140
      %p143 = scmp.ne.s32.totalorder %s128, %s142
      %p144 = scmp.eq.s32.totalorder %s20, 0
      %p145 = por %p143, %p144
      %s146 = ssub.s32 %s21, %s33
      %p147 = scmp.eq.s32.totalorder %s146, 0
      %s149 = sadd.s32 %s148, 1
      %s150 = scalar_select %p147, %s148, %s149
      %p153 = pneg %p147
      %p154 = scmp.eq.s32.totalorder %s14, 1
      %p155 = por %p153, %p154
      %p156 = scmp.ne.s32.totalorder %s148, %s151
      %p157 = scmp.eq.s32.totalorder %s14, 0
      %p158 = por %p156, %p157
      %p159 = scmp.ne.s32.totalorder %s148, %s151
      %p160 = scmp.eq.s32.totalorder %s19, 1
      %p161 = por %p159, %p160
      %p162 = scmp.ne.s32.totalorder %s151, %s152
      %p163 = scmp.eq.s32.totalorder %s19, 0
      %p164 = por %p162, %p163
      %p165 = scmp.ne.s32.totalorder %s151, %s152
      %p166 = scmp.eq.s32.totalorder %s20, 1
      %p167 = por %p165, %p166
      %p169 = scmp.ne.s32.totalorder %s152, %s168
      %p170 = scmp.eq.s32.totalorder %s20, 0
      %p171 = por %p169, %p170
      %p172 = scmp.le.s32.totalorder 1, %s14
      %p173 = scmp.lt.s32.totalorder %s14, 3
      %p174 = pnand %p172, %p173
      %p175 = pneg %p174
      // Predicated region
      $region9: #{conv_network_forward.5} parent=5 // pred_check
        _
      $region10: #{conv_network_forward.5} parent=5 // pred_check_branch
        %177 = sbr.rel (%p174) target = $region12
      $region11: #{conv_network_forward.5} parent=5 // pred_region
        %s178 = ssub.s32 %s14, 1
        // Predicated region
        $region13: #{conv_network_forward.5} parent=11 // pred_check
          %p179 = pneg %p75
        $region14: #{conv_network_forward.5} parent=11 // pred_check_branch
          %181 = sbr.rel (%p179) target = $region16
        $region15: #{conv_network_forward.5} parent=11 // pred_region
          _
        $region16: #{conv_network_forward.5} parent=11 // pred_fallthru
          _
        // Predicated region
        $region17: #{conv_network_forward.5} parent=11 // pred_check
          %p182 = pneg %p96
        $region18: #{conv_network_forward.5} parent=11 // pred_check_branch
          %184 = sbr.rel (%p182) target = $region20
        $region19: #{conv_network_forward.5} parent=11 // pred_region
          _
        $region20: #{conv_network_forward.5} parent=11 // pred_fallthru
          _
        // Predicated region
        $region21: #{conv_network_forward.5} parent=11 // pred_check
          %p185 = pneg %p117
        $region22: #{conv_network_forward.5} parent=11 // pred_check_branch
          %187 = sbr.rel (%p185) target = $region24
        $region23: #{conv_network_forward.5} parent=11 // pred_region
          _
        $region24: #{conv_network_forward.5} parent=11 // pred_fallthru
          _
        // Predicated region
        $region25: #{conv_network_forward.5} parent=11 // pred_check
          %p188 = pneg %p138
        $region26: #{conv_network_forward.5} parent=11 // pred_check_branch
          %190 = sbr.rel (%p188) target = $region28
        $region27: #{conv_network_forward.5} parent=11 // pred_region
          _
        $region28: #{conv_network_forward.5} parent=11 // pred_fallthru
          _
      $region12: #{conv_network_forward.5} parent=5 // pred_fallthru
        _
      %p191 = scmp.lt.s32.totalorder %s14, 2
      // Predicated region
      $region29: #{conv_network_forward.5} parent=5 // pred_check
        %p192 = pneg %p191
      $region30: #{conv_network_forward.5} parent=5 // pred_check_branch
        %194 = sbr.rel (%p192) target = $region32
      $region31: #{conv_network_forward.5} parent=5 // pred_region
        // Predicated region
        $region33: #{conv_network_forward.5} parent=31 // pred_check
          %p195 = pneg %p48
        $region34: #{conv_network_forward.5} parent=31 // pred_check_branch
          %197 = sbr.rel (%p195) target = $region36
        $region35: #{conv_network_forward.5} parent=31 // pred_region
          %s198 = smul.u32 2, %s22
          %p199 = scmp.lt.s32.totalorder %s21, 1
          %s200 = scalar_select %p199, %s21, 1
          %p201 = scmp.lt.s32.totalorder %s198, 1
          %s202 = scalar_select %p201, %s198, 1
          %s203 = smul.addr %s200, 2
          %s204 = sadd.s32 %s202, %s203
          %s205 = smul.addr %s204, 4
          %s206 = scalar_lea.vmem %s0, %s205
          %s207 = smul.u32 2, %s22
        $region36: #{conv_network_forward.5} parent=31 // pred_fallthru
          _
      $region32: #{conv_network_forward.5} parent=5 // pred_fallthru
        _
      %p208 = scmp.le.s32.totalorder 1, %s14
      %p209 = scmp.lt.s32.totalorder %s14, 3
      %p210 = pnand %p208, %p209
      %p211 = pneg %p210
      // Predicated region
      $region37: #{conv_network_forward.5} parent=5 // pred_check
        _
      $region38: #{conv_network_forward.5} parent=5 // pred_check_branch
        %213 = sbr.rel (%p210) target = $region40
      $region39: #{conv_network_forward.5} parent=5 // pred_region
        %s214 = ssub.s32 %s14, 1
        %s215 = smul.u32 2, %s24
        %p216 = scmp.lt.s32.totalorder %s23, 1
        %s217 = scalar_select %p216, %s23, 1
        %p218 = scmp.lt.s32.totalorder %s215, 1
        %s219 = scalar_select %p218, %s215, 1
        %s220 = smul.addr %s217, 2
        %s221 = sadd.s32 %s219, %s220
        %s222 = smul.addr %s221, 4
        %s223 = scalar_lea.vmem %s0, %s222
        %p224 = pneg %p54
        %p225 = pneg %p51
        %p226 = pneg %p75
        %p227 = pneg %p72
        %p228 = pneg %p96
        %p229 = pneg %p93
        %p230 = pneg %p117
        %p231 = pneg %p114
        %p232 = pneg %p138
        %p233 = pneg %p135
        %p234 = pneg %p164
        %p235 = pneg %p161
        %s236 = sand.u32 %s151, 1
        %s237 = scalar_lea.sflag [#allocation4], %s236
        %s238 = sand.u32 %s151, 1
        %s239 = scalar_lea.vmem [#allocation3], %s238
        %s240 = smul.u32 2, %s24
        %p241 = scmp.lt.s32.totalorder %s23, 1
        %s242 = scalar_select %p241, %s23, 1
        %p243 = scmp.lt.s32.totalorder %s240, 1
        %s244 = scalar_select %p243, %s240, 1
        %s245 = smul.addr %s242, 2
        %s246 = sadd.s32 %s244, %s245
        %s247 = smul.addr %s246, 4
        %s248 = scalar_lea.vmem %s0, %s247
        %s249 = smul.u32 2, %s24
        %p251 = scmp.eq.s32.totalorder %s24, 0
        // Predicated region
        $region41: #{conv_network_forward.5} parent=39 // pred_check
          %p252 = pneg %p251
        $region42: #{conv_network_forward.5} parent=39 // pred_check_branch
          %254 = sbr.rel (%p252) target = $region44
        $region43: #{conv_network_forward.5} parent=39 // pred_region
          %255 = vst [vmem:[#allocation2] sm:$0x1] 0.0
        $region44: #{conv_network_forward.5} parent=39 // pred_fallthru
          _
        %v256 = vld [vmem:[%s248] sm:$0xf]
        %v257 = vld [vmem:[%s248 + $0x4] sm:$0xf]
        %v258 = vunpack.c.l.bf16 %v256
        %v259 = vunpack.c.l.bf16 %v257
        %v260 = vld [vmem:[%s1] sm:$0x1]
        %v262 = vlaneseq
        %v263 = vshrl.u32 %v262, 7
        %v264 = vsub.s32 0, %v263
        %v265 = vrot.slane %v260, %v264
        %v267 = vmul.f32 %v258, %v265
        %v268 = vmul.f32 %v259, %v265
        %v269 = vld [vmem:[%s2] sm:$0x1]
        %v271 = vlaneseq
        %v272 = vshrl.u32 %v271, 7
        %v273 = vsub.s32 0, %v272
        %v274 = vrot.slane %v269, %v273
        %v276 = vadd.f32 %v267, %v274
        %v277 = vadd.f32 %v268, %v274
        %v278 = vmax.f32 %v276, 0.0
        %v279 = vmax.f32 %v277, 0.0
        %v280 = vlaneseq
        %v281 = vshrl.u32 %v280, 7
        %v282 = vadd.s32 %v281, 8
        %s283 = smul.u32 %s24, 16
        %v284 = vstv %s283
        %v285 = vadd.s32 %v281, %v284
        %v286 = vadd.s32 %v282, %v284
        %vm287 = vcmp.lt.s32.totalorder %v285, 9
        %vm288 = vcmp.lt.s32.totalorder %v286, 9
        %v289 = vsel %vm287, 1, 0
        %v290 = vsel %vm288, 1, 0
        %vm291 = vcmp.eq.s32.totalorder %v289, 1
        %vm292 = vcmp.eq.s32.totalorder %v290, 1
        %v293 = vsel %vm291, %v278, 0.0
        %v294 = vsel %vm292, %v279, 0.0
        %v295 = vld [vmem:[#allocation2] sm:$0x1]
        %v296 = vadd.f32 %v293, %v294
        %v297 = vrot.slane %v296, 4
        %v298 = vadd.f32 %v296, %v297
        %v299 = vrot.slane %v298, 2
        %v300 = vadd.f32 %v298, %v299
        %v301 = vrot.slane %v300, 1
        %v302 = vadd.f32 %v300, %v301
        %v303 = vadd.f32 %v295, %v302
        %304 = vst [vmem:[#allocation2] sm:$0x1] %v303
        // Predicated region
        $region45: #{conv_network_forward.5} parent=39 // pred_check
          %p305 = pneg %p251
        $region46: #{conv_network_forward.5} parent=39 // pred_check_branch
          %307 = sbr.rel (%p305) target = $region48
        $region47: #{conv_network_forward.5} parent=39 // pred_region
          %v308 = vld [vmem:[#allocation2] sm:$0x1]
          %v309 = vmul.f32 %v308, 0.11111111
          %v310 = vpack.c.bf16 %v309, %v309
          %v311 = vld [vmem:[%s3] sm:$0xf]
          %v312 = vld [vmem:[%s3 + $0x4] sm:$0xf]
          %v313 = vld [vmem:[%s3 + $0x8] sm:$0xf]
          %v314 = vld [vmem:[%s3 + $0xc] sm:$0xf]
          %v315 = vld [vmem:[%s3 + $0x10] sm:$0xf]
          %v316 = vld [vmem:[%s3 + $0x14] sm:$0xf]
          %v317 = vld [vmem:[%s3 + $0x18] sm:$0xf]
          %v318 = vld [vmem:[%s3 + $0x1c] sm:$0xf]
          %v319 = vld [vmem:[%s3 + $0x20] sm:$0xf]
          %v320 = vld [vmem:[%s3 + $0x24] sm:$0xf]
          %v321 = vld [vmem:[%s3 + $0x28] sm:$0xf]
          %v322 = vld [vmem:[%s3 + $0x2c] sm:$0xf]
          %v323 = vld [vmem:[%s3 + $0x30] sm:$0xf]
          %v324 = vld [vmem:[%s3 + $0x34] sm:$0xf]
          %v325 = vld [vmem:[%s3 + $0x38] sm:$0xf]
          %v326 = vld [vmem:[%s3 + $0x3c] sm:$0xf]
          %v327 = vld [vmem:[%s4] sm:$0x1]
          %v344 = vunpack.c.l.b16 %v311
          %v345 = vunpack.c.l.b16 %v312
          %v346 = vunpack.c.l.b16 %v313
          %v347 = vunpack.c.l.b16 %v314
          %v348 = vunpack.c.l.b16 %v315
          %v349 = vunpack.c.l.b16 %v316
          %v350 = vunpack.c.l.b16 %v317
          %v351 = vunpack.c.l.b16 %v318
          %v352 = vunpack.c.l.b16 %v319
          %v353 = vunpack.c.l.b16 %v320
          %v354 = vunpack.c.l.b16 %v321
          %v355 = vunpack.c.l.b16 %v322
          %v356 = vunpack.c.l.b16 %v323
          %v357 = vunpack.c.l.b16 %v324
          %v358 = vunpack.c.l.b16 %v325
          %v359 = vunpack.c.l.b16 %v326
          %v360 = vpack.c.b16 %v345, %v344
          %v361 = vpack.c.b16 %v347, %v346
          %v362 = vpack.c.b16 %v349, %v348
          %v363 = vpack.c.b16 %v351, %v350
          %v364 = vpack.c.b16 %v353, %v352
          %v365 = vpack.c.b16 %v355, %v354
          %v366 = vpack.c.b16 %v357, %v356
          %v367 = vpack.c.b16 %v359, %v358
          %376 = vmatprep.subr.bf16.mxu0 0
          %377 = vmatpush1.bf16.msra.mxu0 %v360
          %378 = vmatprep.subr.bf16.mxu0 0
          %379 = vmatpush1.bf16.msra.mxu0 %v361
          %380 = vmatprep.subr.bf16.mxu0 0
          %381 = vmatpush1.bf16.msra.mxu0 %v362
          %382 = vmatprep.subr.bf16.mxu0 0
          %383 = vmatpush1.bf16.msra.mxu0 %v363
          %384 = vmatprep.subr.bf16.mxu0 0
          %385 = vmatpush1.bf16.msra.mxu0 %v364
          %386 = vmatprep.subr.bf16.mxu0 0
          %387 = vmatpush1.bf16.msra.mxu0 %v365
          %388 = vmatprep.subr.bf16.mxu0 0
          %389 = vmatpush1.bf16.msra.mxu0 %v366
          %390 = vmatprep.subr.bf16.mxu0 0
          %391 = vmatpush1.bf16.msra.mxu0 %v367
          %392 = vmatprep.subr.bf16.mxu0 0
          %393 = vmatpush1.bf16.msra.mxu0 0
          %394 = vmatprep.subr.bf16.mxu0 0
          %395 = vmatpush1.bf16.msra.mxu0 0
          %396 = vmatprep.subr.bf16.mxu0 0
          %397 = vmatpush1.bf16.msra.mxu0 0
          %398 = vmatprep.subr.bf16.mxu0 0
          %399 = vmatpush1.bf16.msra.mxu0 0
          %400 = vmatprep.subr.bf16.mxu0 0
          %401 = vmatpush1.bf16.msra.mxu0 0
          %402 = vmatprep.subr.bf16.mxu0 0
          %403 = vmatpush1.bf16.msra.mxu0 0
          %404 = vmatprep.subr.bf16.mxu0 0
          %405 = vmatpush1.bf16.msra.mxu0 0
          %406 = vmatprep.subr.bf16.mxu0 0
          %407 = vmatpush1.bf16.msra.mxu0 0
          %408 = vmatprep.mubr.bf16.mxu0 0
          %409 = vmatmul.mubr.bf16.gmra.mrb[0].mxu0 %v310
          %v410 = vpop.f32.mrb[0].mxu0
          %v411 = vadd.f32 %v327, %v410
          %v412 = vpop.f32.mrb[0].mxu0
          %v413 = vpop.f32.mrb[0].mxu0
          %v414 = vpop.f32.mrb[0].mxu0
          %415 = vdwg.mxu0
          %416 = vst [vmem:[%s239] sm:$0x1] %v411
        $region48: #{conv_network_forward.5} parent=39 // pred_fallthru
          _
        %s417 = sand.u32 %s151, 1
        %s418 = scalar_lea.sflag [#allocation4], %s417
        %s419 = sand.u32 %s151, 1
        %s420 = scalar_lea.vmem [#allocation3], %s419
        // Predicated region
        $region49: #{conv_network_forward.5} parent=39 // pred_check
          %p421 = pneg %p161
        $region50: #{conv_network_forward.5} parent=39 // pred_check_branch
          %423 = sbr.rel (%p421) target = $region52
        $region51: #{conv_network_forward.5} parent=39 // pred_region
          %s425 = ssub.s32 16, 16
          %426 = vsyncadd %s418, %s425
          %s427 = smul.addr %s23, 16
          %s428 = scalar_lea.hbm %s5, %s427
          %s430 = sshll.u32 %s420, 4
          %s431 = int_to_ptr.vmem [resolvable:$true] %s430
          %433 = dma.vmem_to_hbm [thread:$0]  %s431, 16, %s428, %s418
        $region52: #{conv_network_forward.5} parent=39 // pred_fallthru
          _
      $region40: #{conv_network_forward.5} parent=5 // pred_fallthru
        _
      %p434 = scmp.le.s32.totalorder 2, %s14
      // Predicated region
      $region53: #{conv_network_forward.5} parent=5 // pred_check
        %p435 = pneg %p434
      $region54: #{conv_network_forward.5} parent=5 // pred_check_branch
        %437 = sbr.rel (%p435) target = $region56
      $region55: #{conv_network_forward.5} parent=5 // pred_region
        %s438 = ssub.s32 %s14, 2
        // Predicated region
        $region57: #{conv_network_forward.5} parent=55 // pred_check
          %p439 = pneg %p167
        $region58: #{conv_network_forward.5} parent=55 // pred_check_branch
          %441 = sbr.rel (%p439) target = $region60
        $region59: #{conv_network_forward.5} parent=55 // pred_region
          %s442 = sand.u32 %s152, 1
          %s443 = scalar_lea.sflag [#allocation4], %s442
          %s444 = sand.u32 %s152, 1
          %s445 = scalar_lea.vmem [#allocation3], %s444
          %446 = dma.done %s443, 16
        $region60: #{conv_network_forward.5} parent=55 // pred_fallthru
          _
      $region56: #{conv_network_forward.5} parent=5 // pred_fallthru
        _
    $region6: #{conv_network_forward.5} parent=1 // loop_footer
      %s18 = sadd.s32 1, %s14
    $region7: #{conv_network_forward.5} parent=1 // loop_footer_branch
      %13 = sbr.rel target = $region3
    $region8: #{conv_network_forward.5} parent=1 // loop_exit
      _
    %447 = vsyncpa [#allocation4], 1
    %s448 = scalar_lea.sflag [#allocation4], 1
    %449 = vsyncpa %s448, 1

</llo_original>
